<compile_context>
chip_gen: v5e
topology: v5e:2x2
jax: 0.10.0
libtpu: 0.0.40
codegen_flags: <defaults>
</compile_context>

<pallas_src>
import math

import jax
import jax.numpy as jnp
from jax.experimental import pallas as pl
from jax.experimental.pallas import tpu as pltpu

F32 = jnp.float32


# ----------------------------- elementwise helpers (used inside kernels) ----

def _erf(x):
    # Abramowitz & Stegun 7.1.26 polynomial (|err| < 1.5e-7): exact-GELU parity
    # with torch.nn.GELU() without relying on an erf lowering.
    a1, a2, a3, a4, a5 = 0.254829592, -0.284496736, 1.421413741, -1.453152027, 1.061405429
    p_ = 0.3275911
    s = jnp.where(x < 0.0, -1.0, 1.0)
    ax = jnp.abs(x)
    t = 1.0 / (1.0 + p_ * ax)
    poly = ((((a5 * t + a4) * t + a3) * t + a2) * t + a1) * t
    return s * (1.0 - poly * jnp.exp(-ax * ax))


def _gelu(x):  # exact (erf-based) GELU == torch.nn.GELU()
    return 0.5 * x * (1.0 + _erf(x * 0.7071067811865476))


def _silu(x):
    return x * jax.nn.sigmoid(x)


def _softplus(x):  # numerically stable softplus (matches F.softplus)
    return jnp.where(x > 20.0, x, jnp.log1p(jnp.exp(jnp.minimum(x, 20.0))))


def _layer_norm(x, w, b, eps=1e-5):
    mu = jnp.mean(x, axis=-1, keepdims=True)
    xc = x - mu
    var = jnp.mean(xc * xc, axis=-1, keepdims=True)
    return xc * jax.lax.rsqrt(var + eps) * w + b


# ----------------------------------------------------------- Pallas kernels --

def sum_mlp1_kernel(d_ref, f_ref, lw_ref, lb_ref, w1_ref, b1_ref, w2_ref, b2_ref,
                    o_ref):
    # Fused sumNodeFeatures + MLP1 for one graph b:
    #   h[s] = dist[b, s] @ feats[b]; x_skip = MLP1(h) + h
    # output block is (S, N, H) of the time-major (S, B*N, H) array.
    S, N, H = o_ref.shape
    f = f_ref[0]                                              # (N, H)
    if N % 8 == 0:
        # layout-preserving flatten -> a single MXU pass over all S hops
        h = jnp.dot(d_ref[0].reshape(S * N, N), f, preferred_element_type=F32)
    else:
        h = jnp.concatenate(
            [jnp.dot(d_ref[0, s], f, preferred_element_type=F32)
             for s in range(S)], axis=0)
    y = _layer_norm(h, lw_ref[...], lb_ref[...])
    y = _gelu(jnp.dot(y, w1_ref[...], preferred_element_type=F32) + b1_ref[...])
    y = jnp.dot(y, w2_ref[...], preferred_element_type=F32) + b2_ref[...]
    xs = y + h                                                # (S*N, H)
    if N % 8 == 0:
        o_ref[...] = xs.reshape(S, N, H)
    else:
        for s in range(S):
            o_ref[s] = xs[s * N:(s + 1) * N, :]


def ln_inproj_kernel(x_ref, lw_ref, lb_ref, w_ref, o_ref):
    # pre-Mamba LayerNorm fused with Mamba in_proj (no bias)
    y = _layer_norm(x_ref[...], lw_ref[...], lb_ref[...])
    o_ref[...] = jnp.dot(y, w_ref[...], preferred_element_type=F32)


def mamba_inner_kernel(xz_ref, cw_ref, cb_ref, wdt_in_ref, wdt_ref, bdt_ref,
                       wBC_T_ref, A_ref, D_ref, y_ref):
    # Fused Mamba inner block on T sequences (time-major):
    #   xz_ref : (S, T, 2*d_inner)   [x | z]
    #   cw     : (K, d_inner)   cb : (1, d_inner)
    #   wdt_in : (d_inner, dt_rank)  wdt : (dt_rank, d_inner)  bdt : (1, d_inner)
    #   wBC_T  : (2*d_state, d_inner) = [w_xB^T ; w_xC^T]
    #   A_ref  : (d_state, d_inner) = (-exp(A_log))^T     D_ref : (1, d_inner)
    #   y_ref  : (S, T, d_inner)
    S, T, Dn = y_ref.shape
    ST = S * T
    K = cw_ref.shape[0]
    n = A_ref.shape[0]

    xz = xz_ref[...].reshape(ST, 2 * Dn)   # T % 8 == 0 -> layout-preserving
    x = xz[:, :Dn]                         # (ST, Dn)
    z = xz[:, Dn:]                         # (ST, Dn)

    # causal depthwise conv1d (left pad K-1) + bias + SiLU.
    # rows are ordered r = t*T + i, so a time shift of `ts` is a row shift ts*T.
    acc = x * cw_ref[pl.ds(K - 1, 1), :]
    for k in range(K - 1):
        tshift = K - 1 - k
        if tshift >= S:
            continue
        rshift = tshift * T
        xs = jnp.concatenate(
            [jnp.zeros((rshift, Dn), F32), x[:ST - rshift, :]], axis=0)
        acc = acc + xs * cw_ref[pl.ds(k, 1), :]
    u = _silu(acc + cb_ref[...])                                     # (ST, Dn)

    # x_proj (dt) + dt_proj + softplus; B/C computed directly in (d_state, ST)
    # orientation so the scan reads (d_state, 1) columns with static slices.
    dt_low = jnp.dot(u, wdt_in_ref[...], preferred_element_type=F32)  # (ST, dtr)
    delta = _softplus(jnp.dot(dt_low, wdt_ref[...],
                              preferred_element_type=F32) + bdt_ref[...])
    BC = jnp.dot(wBC_T_ref[...], u.T, preferred_element_type=F32)     # (2n, ST)

    A = A_ref[...]                         # (n, Dn)
    Dv = D_ref[...]                        # (1, Dn)

    # selective scan: state h lives in vregs (no scratch); loops are static and
    # fully unrolled (S, T are small here).
    # TODO(synk): for large S*T switch the inner loops to lax.fori_loop.
    for i in range(T):
        h = jnp.zeros((n, Dn), F32)
        for t in range(S):
            r = t * T + i
            u_t = u[r:r + 1, :]            # (1, Dn)
            dt_t = delta[r:r + 1, :]       # (1, Dn)
            z_t = z[r:r + 1, :]            # (1, Dn)
            b_t = BC[:n, r:r + 1]          # (n, 1)
            c_t = BC[n:, r:r + 1]          # (n, 1)
            dA = jnp.exp(dt_t * A)         # (n, Dn)
            h = dA * h + b_t * (dt_t * u_t)
            y_t = jnp.sum(h * c_t, axis=0, keepdims=True) + Dv * u_t
            y_ref[t, pl.ds(i, 1), :] = y_t * _silu(z_t)


def outproj_mlp2_kernel(y_ref, wo_ref, wg_ref, bg_ref, o_ref):
    # Mamba out_proj (no bias) -> MLP2: GELU -> full-GLU with the two GLU
    # matmuls fused into one (H, 2H) matmul.  Dropouts are identity.
    g = _gelu(jnp.dot(y_ref[...], wo_ref[...], preferred_element_type=F32))
    ag = jnp.dot(g, wg_ref[...], preferred_element_type=F32) + bg_ref[...]
    H = o_ref.shape[1]
    o_ref[...] = ag[:, :H] * jax.nn.sigmoid(ag[:, H:])


# -------------------------------------------------------------- call helpers --

def _round_up(x, m):
    return ((x + m - 1) // m) * m


def _full_spec(shape):
    nd = len(shape)
    return pl.BlockSpec(shape, lambda *_: (0,) * nd)


def _row_call(kernel, x, weights, out_cols, row_tile=512):
    """Tile a row-wise fused kernel over the leading dim with 8-aligned tiles.

    Rows are padded up to a tile multiple (never promoted to a single
    whole-array block), so VMEM use stays bounded and pipelining is preserved.
    """
    M, C = x.shape
    nblocks = max(1, -(-M // row_tile))
    rt = _round_up(-(-M // nblocks), 8)
    Mp = nblocks * rt
    if Mp != M:
        x = jnp.pad(x, ((0, Mp - M), (0, 0)))
    out = pl.pallas_call(
        kernel,
        grid=(nblocks,),
        in_specs=[pl.BlockSpec((rt, C), lambda i: (i, 0))]
                 + [_full_spec(w.shape) for w in weights],
        out_specs=pl.BlockSpec((rt, out_cols), lambda i: (i, 0)),
        out_shape=jax.ShapeDtypeStruct((Mp, out_cols), F32),
        compiler_params=pltpu.CompilerParams(
            dimension_semantics=("parallel",)),
    )(x, *weights)
    return out[:M] if Mp != M else out


def _pick_seq_tile(BN):
    # multiple of 8 (sublane tile) so in-kernel (S,T,.)<->(S*T,.) reshapes are
    # layout-preserving; prefer >= 2 grid steps (v7x megacore).
    for t in (32, 16, 8):
        if BN % t == 0 and BN // t >= 2:
            return t
    return 8


# ------------------------------------------------------------- GMBLayer fwd --

def gmb_layer_forward(inputs, dist_masks, p, *, d_inner, d_state):
    B, N, H = inputs.shape
    S = dist_masks.shape[1]
    BN = B * N

    # one-time, tiny host-side weight re-packing for the fused kernels
    wg = jnp.concatenate([p['wg1'], p['wg2']], axis=1)             # (H, 2H)
    bg = jnp.concatenate([p['bg1'], p['bg2']], axis=1)             # (1, 2H)
    wBC_T = jnp.concatenate([p['w_xB'].T, p['w_xC'].T], axis=0)    # (2n, d_inner)

    # 1) sumNodeFeatures + MLP1 (fused), output in time-major (S, BN, H)
    dm = dist_masks.astype(F32)
    mlp1_w = (p['ln1_w'], p['ln1_b'], p['w1'], p['b1'], p['w2'], p['b2'])
    x_skip = pl.pallas_call(
        sum_mlp1_kernel,
        grid=(B,),
        in_specs=[pl.BlockSpec((1, S, N, N), lambda b: (b, 0, 0, 0)),
                  pl.BlockSpec((1, N, H), lambda b: (b, 0, 0))]
                 + [_full_spec(w.shape) for w in mlp1_w],
        out_specs=pl.BlockSpec((S, N, H), lambda b: (0, b, 0)),
        out_shape=jax.ShapeDtypeStruct((S, BN, H), F32),
        compiler_params=pltpu.CompilerParams(
            dimension_semantics=("parallel",)),
    )(dm, inputs.astype(F32), *mlp1_w)

    # 2) pre-Mamba LayerNorm + in_proj -> (x | z), lane-dense 2*d_inner output
    xz_rows = _row_call(ln_inproj_kernel, x_skip.reshape(S * BN, H),
                        [p['lnm_w'], p['lnm_b'], p['w_in']], 2 * d_inner)
    xz = xz_rows.reshape(S, BN, 2 * d_inner)

    # 3) fused Mamba inner block: conv1d+SiLU -> x_proj/dt_proj -> selective
    #    scan -> SiLU(z) gate; T sequences per grid step, intermediates on-chip.
    T = _pick_seq_tile(BN)
    BNp = BN
    if BN % T != 0:
        BNp = _round_up(BN, T)
        xz = jnp.pad(xz, ((0, 0), (0, BNp - BN), (0, 0)))
    mamba_w = (p['conv_w'], p['conv_b'], p['w_xdt'], p['w_dt'], p['b_dt'],
               wBC_T, p['A_T'], p['D'])
    y = pl.pallas_call(
        mamba_inner_kernel,
        grid=(BNp // T,),
        in_specs=[pl.BlockSpec((S, T, 2 * d_inner), lambda g: (0, g, 0))]
                 + [_full_spec(w.shape) for w in mamba_w],
        out_specs=pl.BlockSpec((S, T, d_inner), lambda g: (0, g, 0)),
        out_shape=jax.ShapeDtypeStruct((S, BNp, d_inner), F32),
        compiler_params=pltpu.CompilerParams(
            dimension_semantics=("parallel",)),
    )(xz, *mamba_w)

    # 4) only hop position s=0 is consumed downstream -> run out_proj + MLP2 on
    #    BN rows instead of BN*S rows.
    y0 = y[0, :BN, :]                                              # (BN, d_inner)
    out0 = _row_call(outproj_mlp2_kernel, y0, [p['w_out'], wg, bg], H)

    # 5) residual with x_skip at s=0
    return (out0 + x_skip[0]).reshape(B, N, H)


# ------------------------------------------------------------ params & ref --

def init_params(key, H, d_state, d_conv, d_inner, dt_rank):
    ks = jax.random.split(key, 17)

    def w(k, shape, scale=0.1):
        return (scale * jax.random.normal(k, shape)).astype(F32)

    A = jnp.tile(jnp.arange(1, d_state + 1, dtype=F32)[None, :], (d_inner, 1))
    return dict(
        # MLP1
        ln1_w=jnp.ones((1, H), F32), ln1_b=jnp.zeros((1, H), F32),
        w1=w(ks[0], (H, H)), b1=w(ks[1], (1, H)),
        w2=w(ks[2], (H, H)), b2=w(ks[3], (1, H)),
        # pre-Mamba LayerNorm
        lnm_w=jnp.ones((1, H), F32), lnm_b=jnp.zeros((1, H), F32),
        # Mamba
        w_in=w(ks[4], (H, 2 * d_inner)),
        conv_w=w(ks[5], (d_conv, d_inner)), conv_b=w(ks[6], (1, d_inner)),
        w_xdt=w(ks[7], (d_inner, dt_rank)),
        w_xB=w(ks[8], (d_inner, d_state)),
        w_xC=w(ks[9], (d_inner, d_state)),
        w_dt=w(ks[10], (dt_rank, d_inner)), b_dt=w(ks[11], (1, d_inner)),
        A_T=(-A).T.astype(F32),                 # (d_state, d_inner) = (-exp(A_log))^T
        D=jnp.ones((1, d_inner), F32),
        w_out=w(ks[12], (d_inner, H)),
        # MLP2 (full-glu)
        wg1=w(ks[13], (H, H)), bg1=w(ks[14], (1, H)),
        wg2=w(ks[15], (H, H)), bg2=w(ks[16], (1, H)),
    )


def reference_forward(inputs, dist_masks, p, *, d_inner, d_state, d_conv):
    """Pure-JAX reference of the same math (for a sanity check)."""
    B, N, H = inputs.shape
    S = dist_masks.shape[1]
    BN = B * N
    dm = dist_masks.astype(F32)
    h = jnp.einsum('bsij,bjh->sbih', dm, inputs.astype(F32))

    def ln(x, w, b):
        return _layer_norm(x, w, b)

    y = ln(h, p['ln1_w'][0], p['ln1_b'][0])
    y = _gelu(y @ p['w1'] + p['b1'][0])
    y = y @ p['w2'] + p['b2'][0]
    x_skip = y + h

    x = x_skip.reshape(S, BN, H).transpose(1, 0, 2)
    x = ln(x, p['lnm_w'][0], p['lnm_b'][0])
    xz = x @ p['w_in']
    xm, z = xz[..., :d_inner], xz[..., d_inner:]

    xpad = jnp.pad(xm, ((0, 0), (d_conv - 1, 0), (0, 0)))
    xc = sum(xpad[:, k:k + S, :] * p['conv_w'][k] for k in range(d_conv)) + p['conv_b'][0]
    xc = _silu(xc)

    dt = xc @ p['w_xdt']
    Bm = xc @ p['w_xB']
    Cm = xc @ p['w_xC']
    delta = _softplus(dt @ p['w_dt'] + p['b_dt'][0])

    A = p['A_T'].T            # (d_inner, d_state)
    Dv = p['D'][0]

    def scan_one(u_s, dl_s, b_s, c_s, z_s):
        def step(hprev, xs):
            u_t, dl_t, b_t, c_t, z_t = xs
            dA = jnp.exp(dl_t[:, None] * A)
            dBu = dl_t[:, None] * b_t[None, :] * u_t[:, None]
            hn = dA * hprev + dBu
            y_t = jnp.sum(hn * c_t[None, :], axis=-1) + Dv * u_t
            return hn, y_t * _silu(z_t)
        _, ys = jax.lax.scan(step, jnp.zeros((d_inner, d_state), F32),
                             (u_s, dl_s, b_s, c_s, z_s))
        return ys

    yscan = jax.vmap(scan_one)(xc, delta, Bm, Cm, z)
    o = yscan @ p['w_out']
    g = _gelu(o)
    out = (g @ p['wg1'] + p['bg1'][0]) * jax.nn.sigmoid(g @ p['wg2'] + p['bg2'][0])
    x0 = out[:, 0, :].reshape(B, N, H)
    return x0 + x_skip[0]


# ------------------------------------------------------------------- main ---

if __name__ == "__main__":
    B, S, N, H = 2, 8, 8, 32
    d_state, d_conv, expand_mamba = 16, 4, 1
    d_inner = expand_mamba * H
    dt_rank = math.ceil(H / 16)

    key = jax.random.PRNGKey(0)
    k_in, k_mask, k_par = jax.random.split(key, 3)
    inputs = jax.random.normal(k_in, (B, N, H), dtype=F32)
    dist_masks = jax.random.bernoulli(k_mask, 0.3, (B, S, N, N)).astype(F32)
    params = init_params(k_par, H, d_state, d_conv, d_inner, dt_rank)

    out = gmb_layer_forward(inputs, dist_masks, params,
                            d_inner=d_inner, d_state=d_state)
    out = jax.block_until_ready(out)

    ref = reference_forward(inputs, dist_masks, params,
                            d_inner=d_inner, d_state=d_state, d_conv=d_conv)
    ref = jax.block_until_ready(ref)

    assert out.shape == (B, N, H), out.shape
    assert bool(jnp.all(jnp.isfinite(out)))
    max_err = float(jnp.max(jnp.abs(out - ref)))
    assert max_err < 5e-2, f"kernel vs reference mismatch: {max_err}"
    print("KERNEL_OK")
</pallas_src>

<mosaic_0001>
module attributes {stable_mosaic.version = 11 : i64} {
  func.func @sum_mlp1_kernel(%arg0: i32, %arg1: memref<1x8x8x8xf32, #tpu.memory_space<vmem>>, %arg2: memref<1x8x32xf32, #tpu.memory_space<vmem>>, %arg3: memref<1x32xf32, #tpu.memory_space<vmem>>, %arg4: memref<1x32xf32, #tpu.memory_space<vmem>>, %arg5: memref<32x32xf32, #tpu.memory_space<vmem>>, %arg6: memref<1x32xf32, #tpu.memory_space<vmem>>, %arg7: memref<32x32xf32, #tpu.memory_space<vmem>>, %arg8: memref<1x32xf32, #tpu.memory_space<vmem>>, %arg9: memref<8x8x32xf32, #tpu.memory_space<vmem>>) attributes {dimension_semantics = [#tpu.dimension_semantics<parallel>], iteration_bounds = array<i64: 2>, scalar_prefetch = 0 : i64, scratch_operands = 0 : i64, tpu.core_type = #tpu.core_type<tc>, window_params = [{transform_indices = @transform_0, window_bounds = array<i64: 1, 8, 8, 8>}, {transform_indices = @transform_1, window_bounds = array<i64: 1, 8, 32>}, {pipeline_mode = #tpu.pipeline_mode<synchronous>, transform_indices = @transform_2, window_bounds = array<i64: 1, 32>}, {pipeline_mode = #tpu.pipeline_mode<synchronous>, transform_indices = @transform_3, window_bounds = array<i64: 1, 32>}, {pipeline_mode = #tpu.pipeline_mode<synchronous>, transform_indices = @transform_4, window_bounds = array<i64: 32, 32>}, {pipeline_mode = #tpu.pipeline_mode<synchronous>, transform_indices = @transform_5, window_bounds = array<i64: 1, 32>}, {pipeline_mode = #tpu.pipeline_mode<synchronous>, transform_indices = @transform_6, window_bounds = array<i64: 32, 32>}, {pipeline_mode = #tpu.pipeline_mode<synchronous>, transform_indices = @transform_7, window_bounds = array<i64: 1, 32>}, {transform_indices = @transform_8, window_bounds = array<i64: 8, 8, 32>}]} {
    %c0 = arith.constant 0 : index
    %c0_0 = arith.constant 0 : index
    %c0_1 = arith.constant 0 : index
    %0 = vector.load %arg2[%c0, %c0_0, %c0_1] : memref<1x8x32xf32, #tpu.memory_space<vmem>>, vector<1x8x32xf32>
    %1 = vector.shape_cast %0 : vector<1x8x32xf32> to vector<8x32xf32>
    %c0_2 = arith.constant 0 : index
    %c0_3 = arith.constant 0 : index
    %c0_4 = arith.constant 0 : index
    %c0_5 = arith.constant 0 : index
    %2 = vector.load %arg1[%c0_2, %c0_3, %c0_4, %c0_5] : memref<1x8x8x8xf32, #tpu.memory_space<vmem>>, vector<1x8x8x8xf32>
    %3 = vector.shape_cast %2 : vector<1x8x8x8xf32> to vector<8x8x8xf32>
    %4 = vector.shape_cast %3 : vector<8x8x8xf32> to vector<64x8xf32>
    %cst = arith.constant dense<0.000000e+00> : vector<64x32xf32>
    %5 = tpu.matmul %4, %1, %cst {dimension_numbers = #tpu.dot_dimension_numbers<[1], [0], [0], [1], [0, 0, 1, 1], [], []>} : vector<64x8xf32>, vector<8x32xf32>, vector<64x32xf32> -> vector<64x32xf32>
    %c0_6 = arith.constant 0 : index
    %c0_7 = arith.constant 0 : index
    %6 = vector.load %arg3[%c0_6, %c0_7] : memref<1x32xf32, #tpu.memory_space<vmem>>, vector<1x32xf32>
    %c0_8 = arith.constant 0 : index
    %c0_9 = arith.constant 0 : index
    %7 = vector.load %arg4[%c0_8, %c0_9] : memref<1x32xf32, #tpu.memory_space<vmem>>, vector<1x32xf32>
    %cst_10 = arith.constant dense<0.000000e+00> : vector<64xf32>
    %8 = vector.multi_reduction <add>, %5, %cst_10 [1] : vector<64x32xf32> to vector<64xf32>
    %9 = vector.shape_cast %8 : vector<64xf32> to vector<64x1xf32>
    %cst_11 = arith.constant 3.200000e+01 : f32
    %10 = vector.broadcast %cst_11 : f32 to vector<64x1xf32>
    %11 = arith.divf %9, %10 : vector<64x1xf32>
    %12 = vector.broadcast %11 : vector<64x1xf32> to vector<64x32xf32>
    %13 = arith.subf %5, %12 : vector<64x32xf32>
    %14 = arith.mulf %13, %13 : vector<64x32xf32>
    %cst_12 = arith.constant dense<0.000000e+00> : vector<64xf32>
    %15 = vector.multi_reduction <add>, %14, %cst_12 [1] : vector<64x32xf32> to vector<64xf32>
    %16 = vector.shape_cast %15 : vector<64xf32> to vector<64x1xf32>
    %cst_13 = arith.constant 3.200000e+01 : f32
    %17 = vector.broadcast %cst_13 : f32 to vector<64x1xf32>
    %18 = arith.divf %16, %17 : vector<64x1xf32>
    %cst_14 = arith.constant 9.99999974E-6 : f32
    %19 = vector.broadcast %cst_14 : f32 to vector<64x1xf32>
    %20 = arith.addf %18, %19 : vector<64x1xf32>
    %21 = math.rsqrt %20 : vector<64x1xf32>
    %22 = vector.broadcast %21 : vector<64x1xf32> to vector<64x32xf32>
    %23 = arith.mulf %13, %22 : vector<64x32xf32>
    %24 = vector.broadcast %6 : vector<1x32xf32> to vector<64x32xf32>
    %25 = arith.mulf %23, %24 : vector<64x32xf32>
    %26 = vector.broadcast %7 : vector<1x32xf32> to vector<64x32xf32>
    %27 = arith.addf %25, %26 : vector<64x32xf32>
    %c0_15 = arith.constant 0 : index
    %c0_16 = arith.constant 0 : index
    %28 = vector.load %arg5[%c0_15, %c0_16] : memref<32x32xf32, #tpu.memory_space<vmem>>, vector<32x32xf32>
    %cst_17 = arith.constant dense<0.000000e+00> : vector<64x32xf32>
    %29 = tpu.matmul %27, %28, %cst_17 {dimension_numbers = #tpu.dot_dimension_numbers<[1], [0], [0], [1], [0, 0, 1, 1], [], []>} : vector<64x32xf32>, vector<32x32xf32>, vector<64x32xf32> -> vector<64x32xf32>
    %c0_18 = arith.constant 0 : index
    %c0_19 = arith.constant 0 : index
    %30 = vector.load %arg6[%c0_18, %c0_19] : memref<1x32xf32, #tpu.memory_space<vmem>>, vector<1x32xf32>
    %31 = vector.broadcast %30 : vector<1x32xf32> to vector<64x32xf32>
    %32 = arith.addf %29, %31 : vector<64x32xf32>
    %cst_20 = arith.constant 5.000000e-01 : f32
    %33 = vector.broadcast %cst_20 : f32 to vector<64x32xf32>
    %34 = arith.mulf %33, %32 : vector<64x32xf32>
    %cst_21 = arith.constant 0.707106769 : f32
    %35 = vector.broadcast %cst_21 : f32 to vector<64x32xf32>
    %36 = arith.mulf %32, %35 : vector<64x32xf32>
    %cst_22 = arith.constant 0.000000e+00 : f32
    %37 = vector.broadcast %cst_22 : f32 to vector<64x32xf32>
    %38 = arith.cmpf olt, %36, %37 : vector<64x32xf32>
    %cst_23 = arith.constant -1.000000e+00 : f32
    %cst_24 = arith.constant 1.000000e+00 : f32
    %39 = vector.broadcast %cst_23 : f32 to vector<64x32xf32>
    %40 = vector.broadcast %cst_24 : f32 to vector<64x32xf32>
    %41 = arith.select %38, %39, %40 : vector<64x32xi1>, vector<64x32xf32>
    %42 = math.absf %36 : vector<64x32xf32>
    %cst_25 = arith.constant 0.327591091 : f32
    %43 = vector.broadcast %cst_25 : f32 to vector<64x32xf32>
    %44 = arith.mulf %43, %42 : vector<64x32xf32>
    %cst_26 = arith.constant 1.000000e+00 : f32
    %45 = vector.broadcast %cst_26 : f32 to vector<64x32xf32>
    %46 = arith.addf %45, %44 : vector<64x32xf32>
    %cst_27 = arith.constant 1.000000e+00 : f32
    %47 = vector.broadcast %cst_27 : f32 to vector<64x32xf32>
    %48 = arith.divf %47, %46 : vector<64x32xf32>
    %cst_28 = arith.constant 1.06140542 : f32
    %49 = vector.broadcast %cst_28 : f32 to vector<64x32xf32>
    %50 = arith.mulf %49, %48 : vector<64x32xf32>
    %cst_29 = arith.constant -1.45315206 : f32
    %51 = vector.broadcast %cst_29 : f32 to vector<64x32xf32>
    %52 = arith.addf %50, %51 : vector<64x32xf32>
    %53 = arith.mulf %52, %48 : vector<64x32xf32>
    %cst_30 = arith.constant 1.42141378 : f32
    %54 = vector.broadcast %cst_30 : f32 to vector<64x32xf32>
    %55 = arith.addf %53, %54 : vector<64x32xf32>
    %56 = arith.mulf %55, %48 : vector<64x32xf32>
    %cst_31 = arith.constant -0.284496725 : f32
    %57 = vector.broadcast %cst_31 : f32 to vector<64x32xf32>
    %58 = arith.addf %56, %57 : vector<64x32xf32>
    %59 = arith.mulf %58, %48 : vector<64x32xf32>
    %cst_32 = arith.constant 0.254829586 : f32
    %60 = vector.broadcast %cst_32 : f32 to vector<64x32xf32>
    %61 = arith.addf %59, %60 : vector<64x32xf32>
    %62 = arith.mulf %61, %48 : vector<64x32xf32>
    %cst_33 = arith.constant 0.000000e+00 : f32
    %63 = vector.broadcast %cst_33 : f32 to vector<64x32xf32>
    %64 = arith.subf %63, %42 : vector<64x32xf32>
    %65 = arith.mulf %64, %42 : vector<64x32xf32>
    %66 = math.exp %65 : vector<64x32xf32>
    %67 = arith.mulf %62, %66 : vector<64x32xf32>
    %cst_34 = arith.constant 1.000000e+00 : f32
    %68 = vector.broadcast %cst_34 : f32 to vector<64x32xf32>
    %69 = arith.subf %68, %67 : vector<64x32xf32>
    %70 = arith.mulf %41, %69 : vector<64x32xf32>
    %cst_35 = arith.constant 1.000000e+00 : f32
    %71 = vector.broadcast %cst_35 : f32 to vector<64x32xf32>
    %72 = arith.addf %71, %70 : vector<64x32xf32>
    %73 = arith.mulf %34, %72 : vector<64x32xf32>
    %c0_36 = arith.constant 0 : index
    %c0_37 = arith.constant 0 : index
    %74 = vector.load %arg7[%c0_36, %c0_37] : memref<32x32xf32, #tpu.memory_space<vmem>>, vector<32x32xf32>
    %cst_38 = arith.constant dense<0.000000e+00> : vector<64x32xf32>
    %75 = tpu.matmul %73, %74, %cst_38 {dimension_numbers = #tpu.dot_dimension_numbers<[1], [0], [0], [1], [0, 0, 1, 1], [], []>} : vector<64x32xf32>, vector<32x32xf32>, vector<64x32xf32> -> vector<64x32xf32>
    %c0_39 = arith.constant 0 : index
    %c0_40 = arith.constant 0 : index
    %76 = vector.load %arg8[%c0_39, %c0_40] : memref<1x32xf32, #tpu.memory_space<vmem>>, vector<1x32xf32>
    %77 = vector.broadcast %76 : vector<1x32xf32> to vector<64x32xf32>
    %78 = arith.addf %75, %77 : vector<64x32xf32>
    %79 = arith.addf %78, %5 : vector<64x32xf32>
    %80 = vector.shape_cast %79 : vector<64x32xf32> to vector<8x8x32xf32>
    %c0_41 = arith.constant 0 : index
    %c0_42 = arith.constant 0 : index
    %c0_43 = arith.constant 0 : index
    %81 = vector.load %arg9[%c0_41, %c0_42, %c0_43] : memref<8x8x32xf32, #tpu.memory_space<vmem>>, vector<8x8x32xf32>
    tpu.vector_store %arg9[%c0_41, %c0_42, %c0_43], %80 {strides = array<i32>} : memref<8x8x32xf32, #tpu.memory_space<vmem>>, vector<8x8x32xf32>,
    return
  }
  func.func @transform_0(%arg0: i32) -> (i32, i32, i32, i32) {
    %c0_i32 = arith.constant 0 : i32
    %c0_i32_0 = arith.constant 0 : i32
    %c0_i32_1 = arith.constant 0 : i32
    %c0_i32_2 = arith.constant 0 : i32
    return %arg0, %c0_i32, %c0_i32_0, %c0_i32_1 : i32, i32, i32, i32
  }
  func.func @transform_1(%arg0: i32) -> (i32, i32, i32) {
    %c0_i32 = arith.constant 0 : i32
    %c0_i32_0 = arith.constant 0 : i32
    %c0_i32_1 = arith.constant 0 : i32
    return %arg0, %c0_i32, %c0_i32_0 : i32, i32, i32
  }
  func.func @transform_2(%arg0: i32) -> (i32, i32) {
    %c0_i32 = arith.constant 0 : i32
    %c0_i32_0 = arith.constant 0 : i32
    %c0_i32_1 = arith.constant 0 : i32
    return %c0_i32, %c0_i32_0 : i32, i32
  }
  func.func @transform_3(%arg0: i32) -> (i32, i32) {
    %c0_i32 = arith.constant 0 : i32
    %c0_i32_0 = arith.constant 0 : i32
    %c0_i32_1 = arith.constant 0 : i32
    return %c0_i32, %c0_i32_0 : i32, i32
  }
  func.func @transform_4(%arg0: i32) -> (i32, i32) {
    %c0_i32 = arith.constant 0 : i32
    %c0_i32_0 = arith.constant 0 : i32
    %c0_i32_1 = arith.constant 0 : i32
    return %c0_i32, %c0_i32_0 : i32, i32
  }
  func.func @transform_5(%arg0: i32) -> (i32, i32) {
    %c0_i32 = arith.constant 0 : i32
    %c0_i32_0 = arith.constant 0 : i32
    %c0_i32_1 = arith.constant 0 : i32
    return %c0_i32, %c0_i32_0 : i32, i32
  }
  func.func @transform_6(%arg0: i32) -> (i32, i32) {
    %c0_i32 = arith.constant 0 : i32
    %c0_i32_0 = arith.constant 0 : i32
    %c0_i32_1 = arith.constant 0 : i32
    return %c0_i32, %c0_i32_0 : i32, i32
  }
  func.func @transform_7(%arg0: i32) -> (i32, i32) {
    %c0_i32 = arith.constant 0 : i32
    %c0_i32_0 = arith.constant 0 : i32
    %c0_i32_1 = arith.constant 0 : i32
    return %c0_i32, %c0_i32_0 : i32, i32
  }
  func.func @transform_8(%arg0: i32) -> (i32, i32, i32) {
    %c0_i32 = arith.constant 0 : i32
    %c0_i32_0 = arith.constant 0 : i32
    %c0_i32_1 = arith.constant 0 : i32
    return %c0_i32, %arg0, %c0_i32_0 : i32, i32, i32
  }
}

</mosaic_0001>

<llo_original>
// kernel: tpu_custom_call.1
$region0: #{tpu_custom_call.1}
  #allocation0 [shape = 'u32[]', space=smem, size = 0x4, offset = 0x4, fixed_abs, tag = 'smem constant byte address 0x4 - core index']
  #allocation1 [shape = 'u32[72,128]{1,0:T(1,128)}', space=vmem, size = 0x9000, scoped, tag = 'internal scratch']
  %s0 = inlined_call_operand.hbm [shape: f32[2,8,8,8], index: 0, kind: input, shape index: {}]
  %s1 = inlined_call_operand.hbm [shape: f32[2,8,32], index: 1, kind: input, shape index: {}]
  %s2 = inlined_call_operand.vmem [shape: f32[1,32], index: 2, kind: input, shape index: {}]
  %s3 = inlined_call_operand.vmem [shape: f32[1,32], index: 3, kind: input, shape index: {}]
  %s4 = inlined_call_operand.hbm [shape: f32[32,32], index: 4, kind: input, shape index: {}]
  %s5 = inlined_call_operand.vmem [shape: f32[1,32], index: 5, kind: input, shape index: {}]
  %s6 = inlined_call_operand.hbm [shape: f32[32,32], index: 6, kind: input, shape index: {}]
  %s7 = inlined_call_operand.vmem [shape: f32[1,32], index: 7, kind: input, shape index: {}]
  %s8 = inlined_call_operand.hbm [shape: f32[8,16,32], index: 8, kind: output, shape index: {}]
  %s9 = sld [smem:[#allocation0]]
  $region81: #{tpu_custom_call.1} parent=0
    _
  %s11 = ssub.s32 1, %s9
  %s12 = scalar_select 0, %s11, %s9
  $region1: #{tpu_custom_call.1} parent=0
    #allocation2 [shape = 'u8[65536]{0}', space=vmem, size = 0x10000, scoped, tag = 'input window, operand 0']
    #allocation3 [shape = 's32[2]{0}', space=sflag, size = 0x8, scoped, tag = 'scoped memory for tpu_custom_call.1']
    #allocation4 [shape = 's32[2]{0}', space=sflag, size = 0x8, scoped, tag = 'scoped memory for tpu_custom_call.1']
    #allocation5 [shape = 'u8[8192]{0}', space=vmem, size = 0x2000, scoped, tag = 'input window, operand 1']
    #allocation6 [shape = 's32[2]{0}', space=sflag, size = 0x8, scoped, tag = 'scoped memory for tpu_custom_call.1']
    #allocation7 [shape = 'u8[16384]{0}', space=vmem, size = 0x4000, scoped, tag = 'input window, operand 4, single buffered']
    #allocation8 [shape = 'u8[16384]{0}', space=vmem, size = 0x4000, scoped, tag = 'input window, operand 6, single buffered']
    #allocation9 [shape = 's32[1]{0}', space=sflag, size = 0x4, scoped, tag = 'scoped memory for tpu_custom_call.1']
    #allocation10 [shape = 'u8[65536]{0}', space=vmem, size = 0x10000, scoped, tag = 'output window, operand 0']
    %13 = vsyncpa [#allocation3], 0
    %s14 = scalar_lea.sflag [#allocation3], 1
    %15 = vsyncpa %s14, 0
    %16 = vsyncpa [#allocation6], 0
    %s17 = scalar_lea.sflag [#allocation6], 1
    %18 = vsyncpa %s17, 0
    %19 = vsyncpa [#allocation9], 0
    %20 = vsyncpa [#allocation4], 0
    %s21 = scalar_lea.sflag [#allocation4], 1
    %22 = vsyncpa %s21, 0
    loop: start=0, step=1, limit=4
    $region2: #{tpu_custom_call.1} parent=1 // loop_pre_header
      _
    $region3: #{tpu_custom_call.1} parent=1 // loop_header
      %s24 = sphi 0, %s28
      %p25 = scmp.ge.s32.totalorder %s24, 4
      %s34 = sphi 0, %s36
      %s37 = sphi 0, %s34
      %s38 = sphi 0, %s37
      %s54 = sphi 0, %s38
      %s60 = sphi 0, %s62
      %s63 = sphi 0, %s60
      %s64 = sphi 0, %s63
      %s80 = sphi 0, %s64
      %s84 = sphi 0, %s84
      %s86 = sphi 0, %s84
      %s87 = sphi 0, %s86
      %s101 = sphi 0, %s87
      %s105 = sphi 0, %s105
      %s107 = sphi 0, %s105
      %s108 = sphi 0, %s107
      %s122 = sphi 0, %s108
      %s126 = sphi 0, %s126
      %s128 = sphi 0, %s126
      %s129 = sphi 0, %s128
      %s143 = sphi 0, %s129
      %s147 = sphi 0, %s147
      %s149 = sphi 0, %s147
      %s150 = sphi 0, %s149
      %s164 = sphi 0, %s150
      %s168 = sphi 0, %s168
      %s170 = sphi 0, %s168
      %s171 = sphi 0, %s170
      %s185 = sphi 0, %s171
      %s189 = sphi 0, %s189
      %s191 = sphi 0, %s189
      %s192 = sphi 0, %s191
      %s206 = sphi 0, %s192
      %s212 = sphi 0, %s214
      %s215 = sphi 0, %s212
      %s216 = sphi 0, %s215
      %s232 = sphi 0, %s216
    $region4: #{tpu_custom_call.1} parent=1 // loop_header_branch
      %27 = sbr.rel (%p25) target = $region8
    $region5: #{tpu_custom_call.1} parent=1 // loop_body
      %s29 = ssub.s32 %s24, 1
      %s30 = ssub.s32 %s24, 2
      %s31 = sadd.s32 %s24, 1
      %s32 = ssub.s32 %s24, %s31
      %p33 = scmp.eq.s32.totalorder %s32, 0
      %s35 = sadd.s32 %s34, 1
      %s36 = scalar_select %p33, %s34, %s35
      %p39 = pneg %p33
      %p40 = scmp.eq.s32.totalorder %s24, 1
      %p41 = por %p39, %p40
      %p42 = scmp.ne.s32.totalorder %s34, %s37
      %p43 = scmp.eq.s32.totalorder %s24, 0
      %p44 = por %p42, %p43
      %p45 = scmp.ne.s32.totalorder %s34, %s37
      %p46 = scmp.eq.s32.totalorder %s29, 1
      %p47 = por %p45, %p46
      %p48 = scmp.ne.s32.totalorder %s37, %s38
      %p49 = scmp.eq.s32.totalorder %s29, 0
      %p50 = por %p48, %p49
      %p51 = scmp.ne.s32.totalorder %s37, %s38
      %p52 = scmp.eq.s32.totalorder %s30, 1
      %p53 = por %p51, %p52
      %p55 = scmp.ne.s32.totalorder %s38, %s54
      %p56 = scmp.eq.s32.totalorder %s30, 0
      %p57 = por %p55, %p56
      %s58 = ssub.s32 %s24, %s31
      %p59 = scmp.eq.s32.totalorder %s58, 0
      %s61 = sadd.s32 %s60, 1
      %s62 = scalar_select %p59, %s60, %s61
      %p65 = pneg %p59
      %p66 = scmp.eq.s32.totalorder %s24, 1
      %p67 = por %p65, %p66
      %p68 = scmp.ne.s32.totalorder %s60, %s63
      %p69 = scmp.eq.s32.totalorder %s24, 0
      %p70 = por %p68, %p69
      %p71 = scmp.ne.s32.totalorder %s60, %s63
      %p72 = scmp.eq.s32.totalorder %s29, 1
      %p73 = por %p71, %p72
      %p74 = scmp.ne.s32.totalorder %s63, %s64
      %p75 = scmp.eq.s32.totalorder %s29, 0
      %p76 = por %p74, %p75
      %p77 = scmp.ne.s32.totalorder %s63, %s64
      %p78 = scmp.eq.s32.totalorder %s30, 1
      %p79 = por %p77, %p78
      %p81 = scmp.ne.s32.totalorder %s64, %s80
      %p82 = scmp.eq.s32.totalorder %s30, 0
      %p83 = por %p81, %p82
      %s85 = sadd.s32 %s84, 1
      %p88 = scmp.eq.s32.totalorder %s24, 1
      %p89 = scmp.ne.s32.totalorder %s84, %s86
      %p90 = scmp.eq.s32.totalorder %s24, 0
      %p91 = por %p89, %p90
      %p92 = scmp.ne.s32.totalorder %s84, %s86
      %p93 = scmp.eq.s32.totalorder %s29, 1
      %p94 = por %p92, %p93
      %p95 = scmp.ne.s32.totalorder %s86, %s87
      %p96 = scmp.eq.s32.totalorder %s29, 0
      %p97 = por %p95, %p96
      %p98 = scmp.ne.s32.totalorder %s86, %s87
      %p99 = scmp.eq.s32.totalorder %s30, 1
      %p100 = por %p98, %p99
      %p102 = scmp.ne.s32.totalorder %s87, %s101
      %p103 = scmp.eq.s32.totalorder %s30, 0
      %p104 = por %p102, %p103
      %s106 = sadd.s32 %s105, 1
      %p109 = scmp.eq.s32.totalorder %s24, 1
      %p110 = scmp.ne.s32.totalorder %s105, %s107
      %p111 = scmp.eq.s32.totalorder %s24, 0
      %p112 = por %p110, %p111
      %p113 = scmp.ne.s32.totalorder %s105, %s107
      %p114 = scmp.eq.s32.totalorder %s29, 1
      %p115 = por %p113, %p114
      %p116 = scmp.ne.s32.totalorder %s107, %s108
      %p117 = scmp.eq.s32.totalorder %s29, 0
      %p118 = por %p116, %p117
      %p119 = scmp.ne.s32.totalorder %s107, %s108
      %p120 = scmp.eq.s32.totalorder %s30, 1
      %p121 = por %p119, %p120
      %p123 = scmp.ne.s32.totalorder %s108, %s122
      %p124 = scmp.eq.s32.totalorder %s30, 0
      %p125 = por %p123, %p124
      %s127 = sadd.s32 %s126, 1
      %p130 = scmp.eq.s32.totalorder %s24, 1
      %p131 = scmp.ne.s32.totalorder %s126, %s128
      %p132 = scmp.eq.s32.totalorder %s24, 0
      %p133 = por %p131, %p132
      %p134 = scmp.ne.s32.totalorder %s126, %s128
      %p135 = scmp.eq.s32.totalorder %s29, 1
      %p136 = por %p134, %p135
      %p137 = scmp.ne.s32.totalorder %s128, %s129
      %p138 = scmp.eq.s32.totalorder %s29, 0
      %p139 = por %p137, %p138
      %p140 = scmp.ne.s32.totalorder %s128, %s129
      %p141 = scmp.eq.s32.totalorder %s30, 1
      %p142 = por %p140, %p141
      %p144 = scmp.ne.s32.totalorder %s129, %s143
      %p145 = scmp.eq.s32.totalorder %s30, 0
      %p146 = por %p144, %p145
      %s148 = sadd.s32 %s147, 1
      %p151 = scmp.eq.s32.totalorder %s24, 1
      %p152 = scmp.ne.s32.totalorder %s147, %s149
      %p153 = scmp.eq.s32.totalorder %s24, 0
      %p154 = por %p152, %p153
      %p155 = scmp.ne.s32.totalorder %s147, %s149
      %p156 = scmp.eq.s32.totalorder %s29, 1
      %p157 = por %p155, %p156
      %p158 = scmp.ne.s32.totalorder %s149, %s150
      %p159 = scmp.eq.s32.totalorder %s29, 0
      %p160 = por %p158, %p159
      %p161 = scmp.ne.s32.totalorder %s149, %s150
      %p162 = scmp.eq.s32.totalorder %s30, 1
      %p163 = por %p161, %p162
      %p165 = scmp.ne.s32.totalorder %s150, %s164
      %p166 = scmp.eq.s32.totalorder %s30, 0
      %p167 = por %p165, %p166
      %s169 = sadd.s32 %s168, 1
      %p172 = scmp.eq.s32.totalorder %s24, 1
      %p173 = scmp.ne.s32.totalorder %s168, %s170
      %p174 = scmp.eq.s32.totalorder %s24, 0
      %p175 = por %p173, %p174
      %p176 = scmp.ne.s32.totalorder %s168, %s170
      %p177 = scmp.eq.s32.totalorder %s29, 1
      %p178 = por %p176, %p177
      %p179 = scmp.ne.s32.totalorder %s170, %s171
      %p180 = scmp.eq.s32.totalorder %s29, 0
      %p181 = por %p179, %p180
      %p182 = scmp.ne.s32.totalorder %s170, %s171
      %p183 = scmp.eq.s32.totalorder %s30, 1
      %p184 = por %p182, %p183
      %p186 = scmp.ne.s32.totalorder %s171, %s185
      %p187 = scmp.eq.s32.totalorder %s30, 0
      %p188 = por %p186, %p187
      %s190 = sadd.s32 %s189, 1
      %p193 = scmp.eq.s32.totalorder %s24, 1
      %p194 = scmp.ne.s32.totalorder %s189, %s191
      %p195 = scmp.eq.s32.totalorder %s24, 0
      %p196 = por %p194, %p195
      %p197 = scmp.ne.s32.totalorder %s189, %s191
      %p198 = scmp.eq.s32.totalorder %s29, 1
      %p199 = por %p197, %p198
      %p200 = scmp.ne.s32.totalorder %s191, %s192
      %p201 = scmp.eq.s32.totalorder %s29, 0
      %p202 = por %p200, %p201
      %p203 = scmp.ne.s32.totalorder %s191, %s192
      %p204 = scmp.eq.s32.totalorder %s30, 1
      %p205 = por %p203, %p204
      %p207 = scmp.ne.s32.totalorder %s192, %s206
      %p208 = scmp.eq.s32.totalorder %s30, 0
      %p209 = por %p207, %p208
      %s210 = ssub.s32 %s24, %s31
      %p211 = scmp.eq.s32.totalorder %s210, 0
      %s213 = sadd.s32 %s212, 1
      %s214 = scalar_select %p211, %s212, %s213
      %p217 = pneg %p211
      %p218 = scmp.eq.s32.totalorder %s24, 1
      %p219 = por %p217, %p218
      %p220 = scmp.ne.s32.totalorder %s212, %s215
      %p221 = scmp.eq.s32.totalorder %s24, 0
      %p222 = por %p220, %p221
      %p223 = scmp.ne.s32.totalorder %s212, %s215
      %p224 = scmp.eq.s32.totalorder %s29, 1
      %p225 = por %p223, %p224
      %p226 = scmp.ne.s32.totalorder %s215, %s216
      %p227 = scmp.eq.s32.totalorder %s29, 0
      %p228 = por %p226, %p227
      %p229 = scmp.ne.s32.totalorder %s215, %s216
      %p230 = scmp.eq.s32.totalorder %s30, 1
      %p231 = por %p229, %p230
      %p233 = scmp.ne.s32.totalorder %s216, %s232
      %p234 = scmp.eq.s32.totalorder %s30, 0
      %p235 = por %p233, %p234
      %p236 = scmp.le.s32.totalorder 1, %s24
      %p237 = scmp.lt.s32.totalorder %s24, 3
      %p238 = pnand %p236, %p237
      %p239 = pneg %p238
      // Predicated region
      $region9: #{tpu_custom_call.1} parent=5 // pred_check
        _
      $region10: #{tpu_custom_call.1} parent=5 // pred_check_branch
        %241 = sbr.rel (%p238) target = $region12
      $region11: #{tpu_custom_call.1} parent=5 // pred_region
        %s242 = ssub.s32 %s24, 1
        // Predicated region
        $region13: #{tpu_custom_call.1} parent=11 // pred_check
          %p243 = pneg %p97
        $region14: #{tpu_custom_call.1} parent=11 // pred_check_branch
          %245 = sbr.rel (%p243) target = $region16
        $region15: #{tpu_custom_call.1} parent=11 // pred_region
          _
        $region16: #{tpu_custom_call.1} parent=11 // pred_fallthru
          _
        // Predicated region
        $region17: #{tpu_custom_call.1} parent=11 // pred_check
          %p246 = pneg %p118
        $region18: #{tpu_custom_call.1} parent=11 // pred_check_branch
          %248 = sbr.rel (%p246) target = $region20
        $region19: #{tpu_custom_call.1} parent=11 // pred_region
          _
        $region20: #{tpu_custom_call.1} parent=11 // pred_fallthru
          _
        // Predicated region
        $region21: #{tpu_custom_call.1} parent=11 // pred_check
          %p249 = pneg %p139
        $region22: #{tpu_custom_call.1} parent=11 // pred_check_branch
          %251 = sbr.rel (%p249) target = $region24
        $region23: #{tpu_custom_call.1} parent=11 // pred_region
          %253 = vsyncadd [#allocation6], 0
          %s254 = sshll.u32 %s4, 4
          %s255 = int_to_ptr.hbm [resolvable:$true] %s254
          %s256 = sshll.u32 [#allocation7], 4
          %s257 = int_to_ptr.vmem [resolvable:$true] %s256
          %262 = dma.hbm_to_vmem [thread:$0]  %s255, 512, %s257, [#allocation6], 128, 128, 8
        $region24: #{tpu_custom_call.1} parent=11 // pred_fallthru
          _
        // Predicated region
        $region25: #{tpu_custom_call.1} parent=11 // pred_check
          %p263 = pneg %p160
        $region26: #{tpu_custom_call.1} parent=11 // pred_check_branch
          %265 = sbr.rel (%p263) target = $region28
        $region27: #{tpu_custom_call.1} parent=11 // pred_region
          _
        $region28: #{tpu_custom_call.1} parent=11 // pred_fallthru
          _
        // Predicated region
        $region29: #{tpu_custom_call.1} parent=11 // pred_check
          %p266 = pneg %p181
        $region30: #{tpu_custom_call.1} parent=11 // pred_check_branch
          %268 = sbr.rel (%p266) target = $region32
        $region31: #{tpu_custom_call.1} parent=11 // pred_region
          %270 = vsyncadd [#allocation9], 0
          %s271 = sshll.u32 %s6, 4
          %s272 = int_to_ptr.hbm [resolvable:$true] %s271
          %s273 = sshll.u32 [#allocation8], 4
          %s274 = int_to_ptr.vmem [resolvable:$true] %s273
          %279 = dma.hbm_to_vmem [thread:$0]  %s272, 512, %s274, [#allocation9], 128, 128, 8
        $region32: #{tpu_custom_call.1} parent=11 // pred_fallthru
          _
        // Predicated region
        $region33: #{tpu_custom_call.1} parent=11 // pred_check
          %p280 = pneg %p202
        $region34: #{tpu_custom_call.1} parent=11 // pred_check_branch
          %282 = sbr.rel (%p280) target = $region36
        $region35: #{tpu_custom_call.1} parent=11 // pred_region
          _
        $region36: #{tpu_custom_call.1} parent=11 // pred_fallthru
          _
      $region12: #{tpu_custom_call.1} parent=5 // pred_fallthru
        _
      %p283 = scmp.lt.s32.totalorder %s24, 2
      // Predicated region
      $region37: #{tpu_custom_call.1} parent=5 // pred_check
        %p284 = pneg %p283
      $region38: #{tpu_custom_call.1} parent=5 // pred_check_branch
        %286 = sbr.rel (%p284) target = $region40
      $region39: #{tpu_custom_call.1} parent=5 // pred_region
        // Predicated region
        $region41: #{tpu_custom_call.1} parent=39 // pred_check
          %p287 = pneg %p44
        $region42: #{tpu_custom_call.1} parent=39 // pred_check_branch
          %289 = sbr.rel (%p287) target = $region44
        $region43: #{tpu_custom_call.1} parent=39 // pred_region
          %s290 = sand.u32 %s34, 1
          %s291 = scalar_lea.sflag [#allocation3], %s290
          %s292 = sand.u32 %s34, 1
          %s293 = smul.addr %s292, 64
          %s294 = scalar_lea.vmem [#allocation2], %s293
          %296 = vsyncadd %s291, 0
          %s297 = smul.addr %s24, 8
          %s298 = smul.addr %s297, 8
          %s299 = scalar_lea.hbm %s0, %s298
          %s300 = sshll.u32 %s299, 4
          %s301 = int_to_ptr.hbm [resolvable:$true] %s300
          %s302 = sshll.u32 %s294, 4
          %s303 = int_to_ptr.vmem [resolvable:$true] %s302
          %308 = dma.hbm_to_vmem [thread:$0]  %s301, 1024, %s303, %s291, 128, 128, 8
        $region44: #{tpu_custom_call.1} parent=39 // pred_fallthru
          _
        // Predicated region
        $region45: #{tpu_custom_call.1} parent=39 // pred_check
          %p309 = pneg %p70
        $region46: #{tpu_custom_call.1} parent=39 // pred_check_branch
          %311 = sbr.rel (%p309) target = $region48
        $region47: #{tpu_custom_call.1} parent=39 // pred_region
          %s312 = sand.u32 %s24, 1
          %s313 = scalar_lea.sflag [#allocation6], %s312
          %s314 = sand.u32 %s60, 1
          %s315 = smul.addr %s314, 8
          %s316 = scalar_lea.vmem [#allocation5], %s315
          %318 = vsyncadd %s313, 0
          %s319 = smul.addr %s24, 8
          %s320 = scalar_lea.hbm %s1, %s319
          %s322 = sshll.u32 %s320, 4
          %s323 = int_to_ptr.hbm [resolvable:$true] %s322
          %s324 = sshll.u32 %s316, 4
          %s325 = int_to_ptr.vmem [resolvable:$true] %s324
          %327 = dma.hbm_to_vmem [thread:$0]  %s323, 128, %s325, %s313
        $region48: #{tpu_custom_call.1} parent=39 // pred_fallthru
          _
      $region40: #{tpu_custom_call.1} parent=5 // pred_fallthru
        _
      %p328 = scmp.le.s32.totalorder 1, %s24
      %p329 = scmp.lt.s32.totalorder %s24, 3
      %p330 = pnand %p328, %p329
      %p331 = pneg %p330
      // Predicated region
      $region49: #{tpu_custom_call.1} parent=5 // pred_check
        _
      $region50: #{tpu_custom_call.1} parent=5 // pred_check_branch
        %333 = sbr.rel (%p330) target = $region52
      $region51: #{tpu_custom_call.1} parent=5 // pred_region
        %s334 = ssub.s32 %s24, 1
        %s335 = sand.u32 %s37, 1
        %s336 = scalar_lea.sflag [#allocation3], %s335
        %s337 = sand.u32 %s37, 1
        %s338 = smul.addr %s337, 64
        %s339 = scalar_lea.vmem [#allocation2], %s338
        // Predicated region
        $region53: #{tpu_custom_call.1} parent=51 // pred_check
          %p340 = pneg %p50
        $region54: #{tpu_custom_call.1} parent=51 // pred_check_branch
          %342 = sbr.rel (%p340) target = $region56
        $region55: #{tpu_custom_call.1} parent=51 // pred_region
          %344 = dma.done %s336, 1024
        $region56: #{tpu_custom_call.1} parent=51 // pred_fallthru
          _
        %s345 = sand.u32 %s29, 1
        %s346 = scalar_lea.sflag [#allocation6], %s345
        %s347 = sand.u32 %s63, 1
        %s348 = smul.addr %s347, 8
        %s349 = scalar_lea.vmem [#allocation5], %s348
        // Predicated region
        $region57: #{tpu_custom_call.1} parent=51 // pred_check
          %p350 = pneg %p76
        $region58: #{tpu_custom_call.1} parent=51 // pred_check_branch
          %352 = sbr.rel (%p350) target = $region60
        $region59: #{tpu_custom_call.1} parent=51 // pred_region
          %354 = dma.done %s346, 128
        $region60: #{tpu_custom_call.1} parent=51 // pred_fallthru
          _
        // Predicated region
        $region61: #{tpu_custom_call.1} parent=51 // pred_check
          %p355 = pneg %p139
        $region62: #{tpu_custom_call.1} parent=51 // pred_check_branch
          %357 = sbr.rel (%p355) target = $region64
        $region63: #{tpu_custom_call.1} parent=51 // pred_region
          %359 = dma.done [#allocation6], 512
        $region64: #{tpu_custom_call.1} parent=51 // pred_fallthru
          _
        // Predicated region
        $region65: #{tpu_custom_call.1} parent=51 // pred_check
          %p360 = pneg %p181
        $region66: #{tpu_custom_call.1} parent=51 // pred_check_branch
          %362 = sbr.rel (%p360) target = $region68
        $region67: #{tpu_custom_call.1} parent=51 // pred_region
          %364 = dma.done [#allocation9], 512
        $region68: #{tpu_custom_call.1} parent=51 // pred_fallthru
          _
        %s365 = sand.u32 %s37, 1
        %s366 = scalar_lea.sflag [#allocation3], %s365
        %s367 = sand.u32 %s37, 1
        %s368 = smul.addr %s367, 64
        %s369 = scalar_lea.vmem [#allocation2], %s368
        %p370 = pneg %p50
        %p371 = pneg %p47
        %s372 = sand.u32 %s29, 1
        %s373 = scalar_lea.sflag [#allocation6], %s372
        %s374 = sand.u32 %s63, 1
        %s375 = smul.addr %s374, 8
        %s376 = scalar_lea.vmem [#allocation5], %s375
        %p377 = pneg %p76
        %p378 = pneg %p73
        %p379 = pneg %p97
        %p380 = pneg %p94
        %p381 = pneg %p118
        %p382 = pneg %p115
        %p383 = pneg %p139
        %p384 = pneg %p136
        %p385 = pneg %p160
        %p386 = pneg %p157
        %p387 = pneg %p181
        %p388 = pneg %p178
        %p389 = pneg %p202
        %p390 = pneg %p199
        %p391 = pneg %p228
        %p392 = pneg %p225
        %s393 = sand.u32 %s215, 1
        %s394 = scalar_lea.sflag [#allocation4], %s393
        %s395 = sand.u32 %s215, 1
        %s396 = smul.addr %s395, 64
        %s397 = scalar_lea.vmem [#allocation10], %s396
        %v398 = vld [vmem:[%s349] sm:$0xff]
        %v399 = vld [vmem:[%s339] sm:$0xff]
        %v400 = vld [vmem:[%s339 + $0x8] sm:$0xff]
        %v401 = vld [vmem:[%s339 + $0x10] sm:$0xff]
        %v402 = vld [vmem:[%s339 + $0x18] sm:$0xff]
        %v403 = vld [vmem:[%s339 + $0x20] sm:$0xff]
        %v404 = vld [vmem:[%s339 + $0x28] sm:$0xff]
        %v405 = vld [vmem:[%s339 + $0x30] sm:$0xff]
        %v406 = vld [vmem:[%s339 + $0x38] sm:$0xff]
        %vm407 = vcmask 64512
        %v409 = vsel %vm407, %v399, 0
        %v412 = vsel %vm407, %v400, 0
        %v415 = vsel %vm407, %v401, 0
        %v418 = vsel %vm407, %v402, 0
        %v421 = vsel %vm407, %v403, 0
        %v424 = vsel %vm407, %v404, 0
        %v427 = vsel %vm407, %v405, 0
        %v430 = vsel %vm407, %v406, 0
        %432 = vmatpush.msra.mxu0 0.0
        %433 = vmatpush.msra.mxu0 0.0
        %434 = vmatpush.msra.mxu0 0.0
        %435 = vmatpush.msra.mxu0 0.0
        %436 = vmatpush.msra.mxu0 0.0
        %437 = vmatpush.msra.mxu0 0.0
        %438 = vmatpush.msra.mxu0 0.0
        %439 = vmatpush.msra.mxu0 0.0
        %440 = vmatpush.msra.mxu0 0.0
        %441 = vmatpush.msra.mxu0 0.0
        %442 = vmatpush.msra.mxu0 0.0
        %443 = vmatpush.msra.mxu0 0.0
        %444 = vmatpush.msra.mxu0 0.0
        %445 = vmatpush.msra.mxu0 0.0
        %446 = vmatpush.msra.mxu0 0.0
        %447 = vmatpush.msra.mxu0 %v398
        %448 = vmatmul.f32.gmra.mxu0 %v409
        %v449 = vpop.f32.mrf.mxu0
        %v450 = vadd.f32 0.0, %v449
        %451 = vmatmul.f32.gmra.mxu0 %v412
        %v452 = vpop.f32.mrf.mxu0
        %v453 = vadd.f32 0.0, %v452
        %454 = vmatmul.f32.gmra.mxu0 %v415
        %v455 = vpop.f32.mrf.mxu0
        %v456 = vadd.f32 0.0, %v455
        %457 = vmatmul.f32.gmra.mxu0 %v418
        %v458 = vpop.f32.mrf.mxu0
        %v459 = vadd.f32 0.0, %v458
        %460 = vmatmul.f32.gmra.mxu0 %v421
        %v461 = vpop.f32.mrf.mxu0
        %v462 = vadd.f32 0.0, %v461
        %463 = vmatmul.f32.gmra.mxu0 %v424
        %v464 = vpop.f32.mrf.mxu0
        %v465 = vadd.f32 0.0, %v464
        %466 = vmatmul.f32.gmra.mxu0 %v427
        %v467 = vpop.f32.mrf.mxu0
        %v468 = vadd.f32 0.0, %v467
        %469 = vmatmul.f32.gmra.mxu0 %v430
        %v470 = vpop.f32.mrf.mxu0
        %v471 = vadd.f32 0.0, %v470
        %472 = vdwg.mxu0
        %v473 = vld [vmem:[%s2] sm:$0x1]
        %v474 = vld [vmem:[%s3] sm:$0x1]
        %vm475 = vcmask 261120
        %v476 = vsel %vm475, %v450, 0.0
        %477 = vadd.xlane.f32.xlu0 %v476
        %v478 = vpop.xlane.xlu0 %477
        %v479 = vsel %vm475, %v453, 0.0
        %480 = vadd.xlane.f32.xlu0 %v479
        %v481 = vpop.xlane.xlu0 %480
        %v482 = vsel %vm475, %v456, 0.0
        %483 = vadd.xlane.f32.xlu0 %v482
        %v484 = vpop.xlane.xlu0 %483
        %v485 = vsel %vm475, %v459, 0.0
        %486 = vadd.xlane.f32.xlu0 %v485
        %v487 = vpop.xlane.xlu0 %486
        %v488 = vsel %vm475, %v462, 0.0
        %489 = vadd.xlane.f32.xlu0 %v488
        %v490 = vpop.xlane.xlu0 %489
        %v491 = vsel %vm475, %v465, 0.0
        %492 = vadd.xlane.f32.xlu0 %v491
        %v493 = vpop.xlane.xlu0 %492
        %v494 = vsel %vm475, %v468, 0.0
        %495 = vadd.xlane.f32.xlu0 %v494
        %v496 = vpop.xlane.xlu0 %495
        %v497 = vsel %vm475, %v471, 0.0
        %498 = vadd.xlane.f32.xlu0 %v497
        %v499 = vpop.xlane.xlu0 %498
        %v500 = vrcp.pop 32.0
        %v501 = vmul.f32 32.0, %v500
        %v502 = vsub.f32 1.0, %v501
        %v503 = vmul.f32 %v500, %v502
        %v504 = vadd.f32 %v500, %v503
        %vm505 = vweird.f32 %v500
        %v506 = vsel %vm505, %v500, %v504
        %v507 = vmul.f32 %v478, %v506
        %v508 = vmul.f32 %v481, %v506
        %v509 = vmul.f32 %v484, %v506
        %v510 = vmul.f32 %v487, %v506
        %v511 = vmul.f32 %v490, %v506
        %v512 = vmul.f32 %v493, %v506
        %v513 = vmul.f32 %v496, %v506
        %v514 = vmul.f32 %v499, %v506
        %v515 = vsub.f32 %v450, %v507
        %v516 = vsub.f32 %v453, %v508
        %v517 = vsub.f32 %v456, %v509
        %v518 = vsub.f32 %v459, %v510
        %v519 = vsub.f32 %v462, %v511
        %v520 = vsub.f32 %v465, %v512
        %v521 = vsub.f32 %v468, %v513
        %v522 = vsub.f32 %v471, %v514
        %v523 = vmul.f32 %v515, %v515
        %v524 = vmul.f32 %v516, %v516
        %v525 = vmul.f32 %v517, %v517
        %v526 = vmul.f32 %v518, %v518
        %v527 = vmul.f32 %v519, %v519
        %v528 = vmul.f32 %v520, %v520
        %v529 = vmul.f32 %v521, %v521
        %v530 = vmul.f32 %v522, %v522
        %v531 = vsel %vm475, %v523, 0.0
        %532 = vadd.xlane.f32.xlu0 %v531
        %v533 = vpop.xlane.xlu0 %532
        %v534 = vsel %vm475, %v524, 0.0
        %535 = vadd.xlane.f32.xlu0 %v534
        %v536 = vpop.xlane.xlu0 %535
        %v537 = vsel %vm475, %v525, 0.0
        %538 = vadd.xlane.f32.xlu0 %v537
        %v539 = vpop.xlane.xlu0 %538
        %v540 = vsel %vm475, %v526, 0.0
        %541 = vadd.xlane.f32.xlu0 %v540
        %v542 = vpop.xlane.xlu0 %541
        %v543 = vsel %vm475, %v527, 0.0
        %544 = vadd.xlane.f32.xlu0 %v543
        %v545 = vpop.xlane.xlu0 %544
        %v546 = vsel %vm475, %v528, 0.0
        %547 = vadd.xlane.f32.xlu0 %v546
        %v548 = vpop.xlane.xlu0 %547
        %v549 = vsel %vm475, %v529, 0.0
        %550 = vadd.xlane.f32.xlu0 %v549
        %v551 = vpop.xlane.xlu0 %550
        %v552 = vsel %vm475, %v530, 0.0
        %553 = vadd.xlane.f32.xlu0 %v552
        %v554 = vpop.xlane.xlu0 %553
        %v555 = vmul.f32 %v533, %v506
        %v556 = vmul.f32 %v536, %v506
        %v557 = vmul.f32 %v539, %v506
        %v558 = vmul.f32 %v542, %v506
        %v559 = vmul.f32 %v545, %v506
        %v560 = vmul.f32 %v548, %v506
        %v561 = vmul.f32 %v551, %v506
        %v562 = vmul.f32 %v554, %v506
        %v563 = vadd.f32 %v555, 1e-05
        %v564 = vadd.f32 %v556, 1e-05
        %v565 = vadd.f32 %v557, 1e-05
        %v566 = vadd.f32 %v558, 1e-05
        %v567 = vadd.f32 %v559, 1e-05
        %v568 = vadd.f32 %v560, 1e-05
        %v569 = vadd.f32 %v561, 1e-05
        %v570 = vadd.f32 %v562, 1e-05
        %v571 = vrsqrt.pop %v563
        %v572 = vmul.f32 %v571, %v563
        %v573 = vmul.f32 %v572, %v571
        %v574 = vmul.f32 0.5, %v573
        %v575 = vsub.f32 1.5, %v574
        %v576 = vmul.f32 %v571, %v575
        %vm577 = vweird.f32 %v563
        %vm578 = vweird.f32 %v571
        %vm579 = vmor %vm577, %vm578
        %v580 = vsel %vm579, %v571, %v576
        %v581 = vrsqrt.pop %v564
        %v582 = vmul.f32 %v581, %v564
        %v583 = vmul.f32 %v582, %v581
        %v584 = vmul.f32 0.5, %v583
        %v585 = vsub.f32 1.5, %v584
        %v586 = vmul.f32 %v581, %v585
        %vm587 = vweird.f32 %v564
        %vm588 = vweird.f32 %v581
        %vm589 = vmor %vm587, %vm588
        %v590 = vsel %vm589, %v581, %v586
        %v591 = vrsqrt.pop %v565
        %v592 = vmul.f32 %v591, %v565
        %v593 = vmul.f32 %v592, %v591
        %v594 = vmul.f32 0.5, %v593
        %v595 = vsub.f32 1.5, %v594
        %v596 = vmul.f32 %v591, %v595
        %vm597 = vweird.f32 %v565
        %vm598 = vweird.f32 %v591
        %vm599 = vmor %vm597, %vm598
        %v600 = vsel %vm599, %v591, %v596
        %v601 = vrsqrt.pop %v566
        %v602 = vmul.f32 %v601, %v566
        %v603 = vmul.f32 %v602, %v601
        %v604 = vmul.f32 0.5, %v603
        %v605 = vsub.f32 1.5, %v604
        %v606 = vmul.f32 %v601, %v605
        %vm607 = vweird.f32 %v566
        %vm608 = vweird.f32 %v601
        %vm609 = vmor %vm607, %vm608
        %v610 = vsel %vm609, %v601, %v606
        %v611 = vrsqrt.pop %v567
        %v612 = vmul.f32 %v611, %v567
        %v613 = vmul.f32 %v612, %v611
        %v614 = vmul.f32 0.5, %v613
        %v615 = vsub.f32 1.5, %v614
        %v616 = vmul.f32 %v611, %v615
        %vm617 = vweird.f32 %v567
        %vm618 = vweird.f32 %v611
        %vm619 = vmor %vm617, %vm618
        %v620 = vsel %vm619, %v611, %v616
        %v621 = vrsqrt.pop %v568
        %v622 = vmul.f32 %v621, %v568
        %v623 = vmul.f32 %v622, %v621
        %v624 = vmul.f32 0.5, %v623
        %v625 = vsub.f32 1.5, %v624
        %v626 = vmul.f32 %v621, %v625
        %vm627 = vweird.f32 %v568
        %vm628 = vweird.f32 %v621
        %vm629 = vmor %vm627, %vm628
        %v630 = vsel %vm629, %v621, %v626
        %v631 = vrsqrt.pop %v569
        %v632 = vmul.f32 %v631, %v569
        %v633 = vmul.f32 %v632, %v631
        %v634 = vmul.f32 0.5, %v633
        %v635 = vsub.f32 1.5, %v634
        %v636 = vmul.f32 %v631, %v635
        %vm637 = vweird.f32 %v569
        %vm638 = vweird.f32 %v631
        %vm639 = vmor %vm637, %vm638
        %v640 = vsel %vm639, %v631, %v636
        %v641 = vrsqrt.pop %v570
        %v642 = vmul.f32 %v641, %v570
        %v643 = vmul.f32 %v642, %v641
        %v644 = vmul.f32 0.5, %v643
        %v645 = vsub.f32 1.5, %v644
        %v646 = vmul.f32 %v641, %v645
        %vm647 = vweird.f32 %v570
        %vm648 = vweird.f32 %v641
        %vm649 = vmor %vm647, %vm648
        %v650 = vsel %vm649, %v641, %v646
        %v651 = vmul.f32 %v515, %v580
        %v652 = vmul.f32 %v516, %v590
        %v653 = vmul.f32 %v517, %v600
        %v654 = vmul.f32 %v518, %v610
        %v655 = vmul.f32 %v519, %v620
        %v656 = vmul.f32 %v520, %v630
        %v657 = vmul.f32 %v521, %v640
        %v658 = vmul.f32 %v522, %v650
        %v660 = vperm.slane %v473, 0
        %v662 = vmul.f32 %v651, %v660
        %v663 = vmul.f32 %v652, %v660
        %v664 = vmul.f32 %v653, %v660
        %v665 = vmul.f32 %v654, %v660
        %v666 = vmul.f32 %v655, %v660
        %v667 = vmul.f32 %v656, %v660
        %v668 = vmul.f32 %v657, %v660
        %v669 = vmul.f32 %v658, %v660
        %v671 = vperm.slane %v474, 0
        %v673 = vadd.f32 %v662, %v671
        %v674 = vadd.f32 %v663, %v671
        %v675 = vadd.f32 %v664, %v671
        %v676 = vadd.f32 %v665, %v671
        %v677 = vadd.f32 %v666, %v671
        %v678 = vadd.f32 %v667, %v671
        %v679 = vadd.f32 %v668, %v671
        %v680 = vadd.f32 %v669, %v671
        %v681 = vld [vmem:[#allocation7] sm:$0xff]
        %v682 = vld [vmem:[#allocation7 + $0x8] sm:$0xff]
        %v683 = vld [vmem:[#allocation7 + $0x10] sm:$0xff]
        %v684 = vld [vmem:[#allocation7 + $0x18] sm:$0xff]
        %v685 = vld [vmem:[%s5] sm:$0x1]
        %v687 = vperm.slane %v685, 0
        %v690 = vsel %vm475, %v673, 0
        %v693 = vsel %vm475, %v674, 0
        %v696 = vsel %vm475, %v675, 0
        %v699 = vsel %vm475, %v676, 0
        %v702 = vsel %vm475, %v677, 0
        %v705 = vsel %vm475, %v678, 0
        %v708 = vsel %vm475, %v679, 0
        %v711 = vsel %vm475, %v680, 0
        %713 = vmatpush.msra.mxu0 0.0
        %714 = vmatpush.msra.mxu0 0.0
        %715 = vmatpush.msra.mxu0 0.0
        %716 = vmatpush.msra.mxu0 0.0
        %717 = vmatpush.msra.mxu0 0.0
        %718 = vmatpush.msra.mxu0 0.0
        %719 = vmatpush.msra.mxu0 0.0
        %720 = vmatpush.msra.mxu0 0.0
        %721 = vmatpush.msra.mxu0 0.0
        %722 = vmatpush.msra.mxu0 0.0
        %723 = vmatpush.msra.mxu0 0.0
        %724 = vmatpush.msra.mxu0 0.0
        %725 = vmatpush.msra.mxu0 %v684
        %726 = vmatpush.msra.mxu0 %v683
        %727 = vmatpush.msra.mxu0 %v682
        %728 = vmatpush.msra.mxu0 %v681
        %729 = vmatmul.f32.gmra.mxu0 %v690
        %v730 = vpop.f32.mrf.mxu0
        %v731 = vadd.f32 %v687, %v730
        %732 = vmatmul.f32.gmra.mxu0 %v693
        %v733 = vpop.f32.mrf.mxu0
        %v734 = vadd.f32 %v687, %v733
        %735 = vmatmul.f32.gmra.mxu0 %v696
        %v736 = vpop.f32.mrf.mxu0
        %v737 = vadd.f32 %v687, %v736
        %738 = vmatmul.f32.gmra.mxu0 %v699
        %v739 = vpop.f32.mrf.mxu0
        %v740 = vadd.f32 %v687, %v739
        %741 = vmatmul.f32.gmra.mxu0 %v702
        %v742 = vpop.f32.mrf.mxu0
        %v743 = vadd.f32 %v687, %v742
        %744 = vmatmul.f32.gmra.mxu0 %v705
        %v745 = vpop.f32.mrf.mxu0
        %v746 = vadd.f32 %v687, %v745
        %747 = vmatmul.f32.gmra.mxu0 %v708
        %v748 = vpop.f32.mrf.mxu0
        %v749 = vadd.f32 %v687, %v748
        %750 = vmatmul.f32.gmra.mxu0 %v711
        %v751 = vpop.f32.mrf.mxu0
        %v752 = vadd.f32 %v687, %v751
        %753 = vdwg.mxu0
        %v754 = vmul.f32 %v731, 0.5
        %v755 = vmul.f32 %v734, 0.5
        %v756 = vmul.f32 %v737, 0.5
        %v757 = vmul.f32 %v740, 0.5
        %v758 = vmul.f32 %v743, 0.5
        %v759 = vmul.f32 %v746, 0.5
        %v760 = vmul.f32 %v749, 0.5
        %v761 = vmul.f32 %v752, 0.5
        %v762 = vmul.f32 %v731, 0.70710677
        %v763 = vmul.f32 %v734, 0.70710677
        %v764 = vmul.f32 %v737, 0.70710677
        %v765 = vmul.f32 %v740, 0.70710677
        %v766 = vmul.f32 %v743, 0.70710677
        %v767 = vmul.f32 %v746, 0.70710677
        %v768 = vmul.f32 %v749, 0.70710677
        %v769 = vmul.f32 %v752, 0.70710677
        %vm770 = vcmp.lt.f32.partialorder %v762, 0.0
        %vm771 = vcmp.lt.f32.partialorder %v763, 0.0
        %vm772 = vcmp.lt.f32.partialorder %v764, 0.0
        %vm773 = vcmp.lt.f32.partialorder %v765, 0.0
        %vm774 = vcmp.lt.f32.partialorder %v766, 0.0
        %vm775 = vcmp.lt.f32.partialorder %v767, 0.0
        %vm776 = vcmp.lt.f32.partialorder %v768, 0.0
        %vm777 = vcmp.lt.f32.partialorder %v769, 0.0
        %v778 = vsel %vm770, -1.0, 1.0
        %v779 = vsel %vm771, -1.0, 1.0
        %v780 = vsel %vm772, -1.0, 1.0
        %v781 = vsel %vm773, -1.0, 1.0
        %v782 = vsel %vm774, -1.0, 1.0
        %v783 = vsel %vm775, -1.0, 1.0
        %v784 = vsel %vm776, -1.0, 1.0
        %v785 = vsel %vm777, -1.0, 1.0
        %v786 = vand.u32 2147483647, %v762
        %v787 = vand.u32 2147483647, %v763
        %v788 = vand.u32 2147483647, %v764
        %v789 = vand.u32 2147483647, %v765
        %v790 = vand.u32 2147483647, %v766
        %v791 = vand.u32 2147483647, %v767
        %v792 = vand.u32 2147483647, %v768
        %v793 = vand.u32 2147483647, %v769
        %v794 = vmul.f32 %v786, 0.3275911
        %v795 = vmul.f32 %v787, 0.3275911
        %v796 = vmul.f32 %v788, 0.3275911
        %v797 = vmul.f32 %v789, 0.3275911
        %v798 = vmul.f32 %v790, 0.3275911
        %v799 = vmul.f32 %v791, 0.3275911
        %v800 = vmul.f32 %v792, 0.3275911
        %v801 = vmul.f32 %v793, 0.3275911
        %v802 = vadd.f32 %v794, 1.0
        %v803 = vadd.f32 %v795, 1.0
        %v804 = vadd.f32 %v796, 1.0
        %v805 = vadd.f32 %v797, 1.0
        %v806 = vadd.f32 %v798, 1.0
        %v807 = vadd.f32 %v799, 1.0
        %v808 = vadd.f32 %v800, 1.0
        %v809 = vadd.f32 %v801, 1.0
        %v810 = vrcp.pop %v802
        %v811 = vmul.f32 %v802, %v810
        %v812 = vsub.f32 1.0, %v811
        %v813 = vmul.f32 %v810, %v812
        %v814 = vadd.f32 %v810, %v813
        %vm815 = vweird.f32 %v802
        %vm816 = vweird.f32 %v810
        %vm817 = vmor %vm815, %vm816
        %v818 = vsel %vm817, %v810, %v814
        %v819 = vand.u32 2147483647, %v802
        %vm820 = vcmp.eq.f32.partialorder %v819, 8.507059e+37
        %v821 = vand.u32 %v802, 2147483648
        %v822 = vor.u32 1.1754944e-38, %v821
        %v823 = vsel %vm820, %v822, %v818
        %v824 = vmul.f32 1.0, %v823
        %v825 = vrcp.pop %v803
        %v826 = vmul.f32 %v803, %v825
        %v827 = vsub.f32 1.0, %v826
        %v828 = vmul.f32 %v825, %v827
        %v829 = vadd.f32 %v825, %v828
        %vm830 = vweird.f32 %v803
        %vm831 = vweird.f32 %v825
        %vm832 = vmor %vm830, %vm831
        %v833 = vsel %vm832, %v825, %v829
        %v834 = vand.u32 2147483647, %v803
        %vm835 = vcmp.eq.f32.partialorder %v834, 8.507059e+37
        %v836 = vand.u32 %v803, 2147483648
        %v837 = vor.u32 1.1754944e-38, %v836
        %v838 = vsel %vm835, %v837, %v833
        %v839 = vmul.f32 1.0, %v838
        %v840 = vrcp.pop %v804
        %v841 = vmul.f32 %v804, %v840
        %v842 = vsub.f32 1.0, %v841
        %v843 = vmul.f32 %v840, %v842
        %v844 = vadd.f32 %v840, %v843
        %vm845 = vweird.f32 %v804
        %vm846 = vweird.f32 %v840
        %vm847 = vmor %vm845, %vm846
        %v848 = vsel %vm847, %v840, %v844
        %v849 = vand.u32 2147483647, %v804
        %vm850 = vcmp.eq.f32.partialorder %v849, 8.507059e+37
        %v851 = vand.u32 %v804, 2147483648
        %v852 = vor.u32 1.1754944e-38, %v851
        %v853 = vsel %vm850, %v852, %v848
        %v854 = vmul.f32 1.0, %v853
        %v855 = vrcp.pop %v805
        %v856 = vmul.f32 %v805, %v855
        %v857 = vsub.f32 1.0, %v856
        %v858 = vmul.f32 %v855, %v857
        %v859 = vadd.f32 %v855, %v858
        %vm860 = vweird.f32 %v805
        %vm861 = vweird.f32 %v855
        %vm862 = vmor %vm860, %vm861
        %v863 = vsel %vm862, %v855, %v859
        %v864 = vand.u32 2147483647, %v805
        %vm865 = vcmp.eq.f32.partialorder %v864, 8.507059e+37
        %v866 = vand.u32 %v805, 2147483648
        %v867 = vor.u32 1.1754944e-38, %v866
        %v868 = vsel %vm865, %v867, %v863
        %v869 = vmul.f32 1.0, %v868
        %v870 = vrcp.pop %v806
        %v871 = vmul.f32 %v806, %v870
        %v872 = vsub.f32 1.0, %v871
        %v873 = vmul.f32 %v870, %v872
        %v874 = vadd.f32 %v870, %v873
        %vm875 = vweird.f32 %v806
        %vm876 = vweird.f32 %v870
        %vm877 = vmor %vm875, %vm876
        %v878 = vsel %vm877, %v870, %v874
        %v879 = vand.u32 2147483647, %v806
        %vm880 = vcmp.eq.f32.partialorder %v879, 8.507059e+37
        %v881 = vand.u32 %v806, 2147483648
        %v882 = vor.u32 1.1754944e-38, %v881
        %v883 = vsel %vm880, %v882, %v878
        %v884 = vmul.f32 1.0, %v883
        %v885 = vrcp.pop %v807
        %v886 = vmul.f32 %v807, %v885
        %v887 = vsub.f32 1.0, %v886
        %v888 = vmul.f32 %v885, %v887
        %v889 = vadd.f32 %v885, %v888
        %vm890 = vweird.f32 %v807
        %vm891 = vweird.f32 %v885
        %vm892 = vmor %vm890, %vm891
        %v893 = vsel %vm892, %v885, %v889
        %v894 = vand.u32 2147483647, %v807
        %vm895 = vcmp.eq.f32.partialorder %v894, 8.507059e+37
        %v896 = vand.u32 %v807, 2147483648
        %v897 = vor.u32 1.1754944e-38, %v896
        %v898 = vsel %vm895, %v897, %v893
        %v899 = vmul.f32 1.0, %v898
        %v900 = vrcp.pop %v808
        %v901 = vmul.f32 %v808, %v900
        %v902 = vsub.f32 1.0, %v901
        %v903 = vmul.f32 %v900, %v902
        %v904 = vadd.f32 %v900, %v903
        %vm905 = vweird.f32 %v808
        %vm906 = vweird.f32 %v900
        %vm907 = vmor %vm905, %vm906
        %v908 = vsel %vm907, %v900, %v904
        %v909 = vand.u32 2147483647, %v808
        %vm910 = vcmp.eq.f32.partialorder %v909, 8.507059e+37
        %v911 = vand.u32 %v808, 2147483648
        %v912 = vor.u32 1.1754944e-38, %v911
        %v913 = vsel %vm910, %v912, %v908
        %v914 = vmul.f32 1.0, %v913
        %v915 = vrcp.pop %v809
        %v916 = vmul.f32 %v809, %v915
        %v917 = vsub.f32 1.0, %v916
        %v918 = vmul.f32 %v915, %v917
        %v919 = vadd.f32 %v915, %v918
        %vm920 = vweird.f32 %v809
        %vm921 = vweird.f32 %v915
        %vm922 = vmor %vm920, %vm921
        %v923 = vsel %vm922, %v915, %v919
        %v924 = vand.u32 2147483647, %v809
        %vm925 = vcmp.eq.f32.partialorder %v924, 8.507059e+37
        %v926 = vand.u32 %v809, 2147483648
        %v927 = vor.u32 1.1754944e-38, %v926
        %v928 = vsel %vm925, %v927, %v923
        %v929 = vmul.f32 1.0, %v928
        %v930 = vmul.f32 %v824, 1.0614054
        %v931 = vmul.f32 %v839, 1.0614054
        %v932 = vmul.f32 %v854, 1.0614054
        %v933 = vmul.f32 %v869, 1.0614054
        %v934 = vmul.f32 %v884, 1.0614054
        %v935 = vmul.f32 %v899, 1.0614054
        %v936 = vmul.f32 %v914, 1.0614054
        %v937 = vmul.f32 %v929, 1.0614054
        %v938 = vadd.f32 %v930, -1.4531521
        %v939 = vadd.f32 %v931, -1.4531521
        %v940 = vadd.f32 %v932, -1.4531521
        %v941 = vadd.f32 %v933, -1.4531521
        %v942 = vadd.f32 %v934, -1.4531521
        %v943 = vadd.f32 %v935, -1.4531521
        %v944 = vadd.f32 %v936, -1.4531521
        %v945 = vadd.f32 %v937, -1.4531521
        %v946 = vmul.f32 %v938, %v824
        %v947 = vmul.f32 %v939, %v839
        %v948 = vmul.f32 %v940, %v854
        %v949 = vmul.f32 %v941, %v869
        %v950 = vmul.f32 %v942, %v884
        %v951 = vmul.f32 %v943, %v899
        %v952 = vmul.f32 %v944, %v914
        %v953 = vmul.f32 %v945, %v929
        %v954 = vadd.f32 %v946, 1.4214138
        %v955 = vadd.f32 %v947, 1.4214138
        %v956 = vadd.f32 %v948, 1.4214138
        %v957 = vadd.f32 %v949, 1.4214138
        %v958 = vadd.f32 %v950, 1.4214138
        %v959 = vadd.f32 %v951, 1.4214138
        %v960 = vadd.f32 %v952, 1.4214138
        %v961 = vadd.f32 %v953, 1.4214138
        %v962 = vmul.f32 %v954, %v824
        %v963 = vmul.f32 %v955, %v839
        %v964 = vmul.f32 %v956, %v854
        %v965 = vmul.f32 %v957, %v869
        %v966 = vmul.f32 %v958, %v884
        %v967 = vmul.f32 %v959, %v899
        %v968 = vmul.f32 %v960, %v914
        %v969 = vmul.f32 %v961, %v929
        %v970 = vadd.f32 %v962, -0.28449672
        %v971 = vadd.f32 %v963, -0.28449672
        %v972 = vadd.f32 %v964, -0.28449672
        %v973 = vadd.f32 %v965, -0.28449672
        %v974 = vadd.f32 %v966, -0.28449672
        %v975 = vadd.f32 %v967, -0.28449672
        %v976 = vadd.f32 %v968, -0.28449672
        %v977 = vadd.f32 %v969, -0.28449672
        %v978 = vmul.f32 %v970, %v824
        %v979 = vmul.f32 %v971, %v839
        %v980 = vmul.f32 %v972, %v854
        %v981 = vmul.f32 %v973, %v869
        %v982 = vmul.f32 %v974, %v884
        %v983 = vmul.f32 %v975, %v899
        %v984 = vmul.f32 %v976, %v914
        %v985 = vmul.f32 %v977, %v929
        %v986 = vadd.f32 %v978, 0.2548296
        %v987 = vadd.f32 %v979, 0.2548296
        %v988 = vadd.f32 %v980, 0.2548296
        %v989 = vadd.f32 %v981, 0.2548296
        %v990 = vadd.f32 %v982, 0.2548296
        %v991 = vadd.f32 %v983, 0.2548296
        %v992 = vadd.f32 %v984, 0.2548296
        %v993 = vadd.f32 %v985, 0.2548296
        %v994 = vmul.f32 %v986, %v824
        %v995 = vmul.f32 %v987, %v839
        %v996 = vmul.f32 %v988, %v854
        %v997 = vmul.f32 %v989, %v869
        %v998 = vmul.f32 %v990, %v884
        %v999 = vmul.f32 %v991, %v899
        %v1000 = vmul.f32 %v992, %v914
        %v1001 = vmul.f32 %v993, %v929
        %v1002 = vsub.f32 0.0, %v786
        %v1003 = vsub.f32 0.0, %v787
        %v1004 = vsub.f32 0.0, %v788
        %v1005 = vsub.f32 0.0, %v789
        %v1006 = vsub.f32 0.0, %v790
        %v1007 = vsub.f32 0.0, %v791
        %v1008 = vsub.f32 0.0, %v792
        %v1009 = vsub.f32 0.0, %v793
        %v1010 = vmul.f32 %v1002, %v786
        %v1011 = vmul.f32 %v1003, %v787
        %v1012 = vmul.f32 %v1004, %v788
        %v1013 = vmul.f32 %v1005, %v789
        %v1014 = vmul.f32 %v1006, %v790
        %v1015 = vmul.f32 %v1007, %v791
        %v1016 = vmul.f32 %v1008, %v792
        %v1017 = vmul.f32 %v1009, %v793
        %v1018 = vmul.f32 %v1010, 1.442695
        %v1019 = vpow.pop %v1018
        %v1020 = vmul.f32 %v1011, 1.442695
        %v1021 = vpow.pop %v1020
        %v1022 = vmul.f32 %v1012, 1.442695
        %v1023 = vpow.pop %v1022
        %v1024 = vmul.f32 %v1013, 1.442695
        %v1025 = vpow.pop %v1024
        %v1026 = vmul.f32 %v1014, 1.442695
        %v1027 = vpow.pop %v1026
        %v1028 = vmul.f32 %v1015, 1.442695
        %v1029 = vpow.pop %v1028
        %v1030 = vmul.f32 %v1016, 1.442695
        %v1031 = vpow.pop %v1030
        %v1032 = vmul.f32 %v1017, 1.442695
        %v1033 = vpow.pop %v1032
        %v1034 = vmul.f32 %v994, %v1019
        %v1035 = vmul.f32 %v995, %v1021
        %v1036 = vmul.f32 %v996, %v1023
        %v1037 = vmul.f32 %v997, %v1025
        %v1038 = vmul.f32 %v998, %v1027
        %v1039 = vmul.f32 %v999, %v1029
        %v1040 = vmul.f32 %v1000, %v1031
        %v1041 = vmul.f32 %v1001, %v1033
        %v1042 = vsub.f32 1.0, %v1034
        %v1043 = vsub.f32 1.0, %v1035
        %v1044 = vsub.f32 1.0, %v1036
        %v1045 = vsub.f32 1.0, %v1037
        %v1046 = vsub.f32 1.0, %v1038
        %v1047 = vsub.f32 1.0, %v1039
        %v1048 = vsub.f32 1.0, %v1040
        %v1049 = vsub.f32 1.0, %v1041
        %v1050 = vmul.f32 %v778, %v1042
        %v1051 = vmul.f32 %v779, %v1043
        %v1052 = vmul.f32 %v780, %v1044
        %v1053 = vmul.f32 %v781, %v1045
        %v1054 = vmul.f32 %v782, %v1046
        %v1055 = vmul.f32 %v783, %v1047
        %v1056 = vmul.f32 %v784, %v1048
        %v1057 = vmul.f32 %v785, %v1049
        %v1058 = vadd.f32 %v1050, 1.0
        %v1059 = vadd.f32 %v1051, 1.0
        %v1060 = vadd.f32 %v1052, 1.0
        %v1061 = vadd.f32 %v1053, 1.0
        %v1062 = vadd.f32 %v1054, 1.0
        %v1063 = vadd.f32 %v1055, 1.0
        %v1064 = vadd.f32 %v1056, 1.0
        %v1065 = vadd.f32 %v1057, 1.0
        %v1066 = vmul.f32 %v754, %v1058
        %v1067 = vmul.f32 %v755, %v1059
        %v1068 = vmul.f32 %v756, %v1060
        %v1069 = vmul.f32 %v757, %v1061
        %v1070 = vmul.f32 %v758, %v1062
        %v1071 = vmul.f32 %v759, %v1063
        %v1072 = vmul.f32 %v760, %v1064
        %v1073 = vmul.f32 %v761, %v1065
        %v1074 = vld [vmem:[#allocation8] sm:$0xff]
        %v1075 = vld [vmem:[#allocation8 + $0x8] sm:$0xff]
        %v1076 = vld [vmem:[#allocation8 + $0x10] sm:$0xff]
        %v1077 = vld [vmem:[#allocation8 + $0x18] sm:$0xff]
        %v1078 = vld [vmem:[%s7] sm:$0x1]
        %v1080 = vperm.slane %v1078, 0
        %v1083 = vsel %vm475, %v1066, 0
        %v1086 = vsel %vm475, %v1067, 0
        %v1089 = vsel %vm475, %v1068, 0
        %v1092 = vsel %vm475, %v1069, 0
        %v1095 = vsel %vm475, %v1070, 0
        %v1098 = vsel %vm475, %v1071, 0
        %v1101 = vsel %vm475, %v1072, 0
        %v1104 = vsel %vm475, %v1073, 0
        %1106 = vmatpush.msra.mxu0 0.0
        %1107 = vmatpush.msra.mxu0 0.0
        %1108 = vmatpush.msra.mxu0 0.0
        %1109 = vmatpush.msra.mxu0 0.0
        %1110 = vmatpush.msra.mxu0 0.0
        %1111 = vmatpush.msra.mxu0 0.0
        %1112 = vmatpush.msra.mxu0 0.0
        %1113 = vmatpush.msra.mxu0 0.0
        %1114 = vmatpush.msra.mxu0 0.0
        %1115 = vmatpush.msra.mxu0 0.0
        %1116 = vmatpush.msra.mxu0 0.0
        %1117 = vmatpush.msra.mxu0 0.0
        %1118 = vmatpush.msra.mxu0 %v1077
        %1119 = vmatpush.msra.mxu0 %v1076
        %1120 = vmatpush.msra.mxu0 %v1075
        %1121 = vmatpush.msra.mxu0 %v1074
        %1122 = vmatmul.f32.gmra.mxu0 %v1083
        %v1123 = vpop.f32.mrf.mxu0
        %v1124 = vadd.f32 %v1080, %v1123
        %1125 = vmatmul.f32.gmra.mxu0 %v1086
        %v1126 = vpop.f32.mrf.mxu0
        %v1127 = vadd.f32 %v1080, %v1126
        %1128 = vmatmul.f32.gmra.mxu0 %v1089
        %v1129 = vpop.f32.mrf.mxu0
        %v1130 = vadd.f32 %v1080, %v1129
        %1131 = vmatmul.f32.gmra.mxu0 %v1092
        %v1132 = vpop.f32.mrf.mxu0
        %v1133 = vadd.f32 %v1080, %v1132
        %1134 = vmatmul.f32.gmra.mxu0 %v1095
        %v1135 = vpop.f32.mrf.mxu0
        %v1136 = vadd.f32 %v1080, %v1135
        %1137 = vmatmul.f32.gmra.mxu0 %v1098
        %v1138 = vpop.f32.mrf.mxu0
        %v1139 = vadd.f32 %v1080, %v1138
        %1140 = vmatmul.f32.gmra.mxu0 %v1101
        %v1141 = vpop.f32.mrf.mxu0
        %v1142 = vadd.f32 %v1080, %v1141
        %1143 = vmatmul.f32.gmra.mxu0 %v1104
        %v1144 = vpop.f32.mrf.mxu0
        %v1145 = vadd.f32 %v1080, %v1144
        %1146 = vdwg.mxu0
        %v1147 = vadd.f32 %v1124, %v450
        %v1148 = vadd.f32 %v1127, %v453
        %v1149 = vadd.f32 %v1130, %v456
        %v1150 = vadd.f32 %v1133, %v459
        %v1151 = vadd.f32 %v1136, %v462
        %v1152 = vadd.f32 %v1139, %v465
        %v1153 = vadd.f32 %v1142, %v468
        %v1154 = vadd.f32 %v1145, %v471
        %1155 = vst.msk [vmem:[%s397] sm:$0xff] %vm475, %v1147
        %1156 = vst.msk [vmem:[%s397 + $0x8] sm:$0xff] %vm475, %v1148
        %1157 = vst.msk [vmem:[%s397 + $0x10] sm:$0xff] %vm475, %v1149
        %1158 = vst.msk [vmem:[%s397 + $0x18] sm:$0xff] %vm475, %v1150
        %1159 = vst.msk [vmem:[%s397 + $0x20] sm:$0xff] %vm475, %v1151
        %1160 = vst.msk [vmem:[%s397 + $0x28] sm:$0xff] %vm475, %v1152
        %1161 = vst.msk [vmem:[%s397 + $0x30] sm:$0xff] %vm475, %v1153
        %1162 = vst.msk [vmem:[%s397 + $0x38] sm:$0xff] %vm475, %v1154
        %s1163 = sand.u32 %s215, 1
        %s1164 = scalar_lea.sflag [#allocation4], %s1163
        %s1165 = sand.u32 %s215, 1
        %s1166 = smul.addr %s1165, 64
        %s1167 = scalar_lea.vmem [#allocation10], %s1166
        // Predicated region
        $region69: #{tpu_custom_call.1} parent=51 // pred_check
          %p1168 = pneg %p225
        $region70: #{tpu_custom_call.1} parent=51 // pred_check_branch
          %1170 = sbr.rel (%p1168) target = $region72
        $region71: #{tpu_custom_call.1} parent=51 // pred_region
          %1172 = vsyncadd %s1164, 0
          %s1173 = smul.addr %s29, 8
          %s1174 = scalar_lea.hbm %s8, %s1173
          %s1175 = sshll.u32 %s1167, 4
          %s1176 = int_to_ptr.vmem [resolvable:$true] %s1175
          %s1177 = sshll.u32 %s1174, 4
          %s1178 = int_to_ptr.hbm [resolvable:$true] %s1177
          %1183 = dma.vmem_to_hbm [thread:$0]  %s1176, 1024, %s1178, %s1164, 128, 256, 8
        $region72: #{tpu_custom_call.1} parent=51 // pred_fallthru
          _
      $region52: #{tpu_custom_call.1} parent=5 // pred_fallthru
        _
      %p1184 = scmp.le.s32.totalorder 2, %s24
      // Predicated region
      $region73: #{tpu_custom_call.1} parent=5 // pred_check
        %p1185 = pneg %p1184
      $region74: #{tpu_custom_call.1} parent=5 // pred_check_branch
        %1187 = sbr.rel (%p1185) target = $region76
      $region75: #{tpu_custom_call.1} parent=5 // pred_region
        %s1188 = ssub.s32 %s24, 2
        // Predicated region
        $region77: #{tpu_custom_call.1} parent=75 // pred_check
          %p1189 = pneg %p231
        $region78: #{tpu_custom_call.1} parent=75 // pred_check_branch
          %1191 = sbr.rel (%p1189) target = $region80
        $region79: #{tpu_custom_call.1} parent=75 // pred_region
          %s1192 = sand.u32 %s216, 1
          %s1193 = scalar_lea.sflag [#allocation4], %s1192
          %s1194 = sand.u32 %s216, 1
          %s1195 = smul.addr %s1194, 64
          %s1196 = scalar_lea.vmem [#allocation10], %s1195
          %1198 = dma.done %s1193, 1024
        $region80: #{tpu_custom_call.1} parent=75 // pred_fallthru
          _
      $region76: #{tpu_custom_call.1} parent=5 // pred_fallthru
        _
    $region6: #{tpu_custom_call.1} parent=1 // loop_footer
      %s28 = sadd.s32 1, %s24
    $region7: #{tpu_custom_call.1} parent=1 // loop_footer_branch
      %23 = sbr.rel target = $region3
    $region8: #{tpu_custom_call.1} parent=1 // loop_exit
      _
    %1199 = vsyncpa [#allocation3], 1
    %s1200 = scalar_lea.sflag [#allocation3], 1
    %1201 = vsyncpa %s1200, 1
    %1202 = vsyncpa [#allocation6], 1
    %s1203 = scalar_lea.sflag [#allocation6], 1
    %1204 = vsyncpa %s1203, 1
    %1205 = vsyncpa [#allocation9], 1
    %1206 = vsyncpa [#allocation4], 1
    %s1207 = scalar_lea.sflag [#allocation4], 1
    %1208 = vsyncpa %s1207, 1

</llo_original>
